<compile_context>
chip_gen: v7x
topology: tpu7x:2x2x1
jax: 0.10.0
libtpu: 0.0.40
codegen_flags: <defaults>
</compile_context>

<pallas_src>
import jax
import jax.numpy as jnp
from jax.experimental import pallas as pl
from jax.experimental.pallas import tpu as pltpu


# ----------------------------------------------------------------------------
# Fused kernel: conv3x3(+bias+ReLU) -> flatten -> Linear -> ReLU -> Linear
# ----------------------------------------------------------------------------
def fused_pipeline_kernel(patches_ref, wct_ref, bc_ref, w1p_ref, b1_ref,
                          w2_ref, b2_ref, o_ref):
    # patches_ref: (9*Cin, N*H*W)   im2col'd input, transposed (lane = N*H*W)
    # wct_ref:     (Cout, 9*Cin)    conv weight, transposed
    # bc_ref:      (Cout, 1)        conv bias (broadcasts along lanes)
    # w1p_ref:     (Cout, HW, HID)  fc1 weight re-grouped per conv channel
    # b1_ref:      (1, HID)
    # w2_ref:      (HID, NCLS)
    # b2_ref:      (1, NCLS)
    # o_ref:       (N, NCLS)
    cout = wct_ref.shape[0]
    hw = w1p_ref.shape[1]
    n_batch = o_ref.shape[0]

    # ---- feature extractor: 3x3 "same" conv as a single im2col matmul ----
    # (Cout, 9*Cin) @ (9*Cin, N*HW) -> (Cout, N*HW), f32 accumulation on MXU.
    conv_t = jnp.dot(wct_ref[...], patches_ref[...],
                     preferred_element_type=jnp.float32)
    conv_t = jnp.maximum(conv_t + bc_ref[...], 0.0)          # bias + ReLU

    # ---- task classifier: Linear(F, HID) -> ReLU -> Linear(HID, NCLS) ----
    # feat[n, hw*Cout + c] = conv_t[c, n*HW + hw]; the fc1 contraction is
    # decomposed per conv channel so no activation reshape is needed:
    #   h[n] = b1 + sum_c conv_t[c, n*HW:(n+1)*HW] @ w1p[c]
    b1 = b1_ref[...]
    h_acc = [b1 for _ in range(n_batch)]
    for c in range(cout):                                    # static unroll (8)
        w1c = w1p_ref[c]                                     # (HW, HID)
        row_c = conv_t[c:c + 1, :]                           # (1, N*HW)
        for n in range(n_batch):                             # static unroll (2)
            h_acc[n] = h_acc[n] + jnp.dot(
                row_c[:, n * hw:(n + 1) * hw], w1c,          # lane offset % 128 == 0
                preferred_element_type=jnp.float32)

    w2 = w2_ref[...]
    b2 = b2_ref[...]
    for n in range(n_batch):
        h = jnp.maximum(h_acc[n], 0.0)
        out_n = jnp.dot(h, w2, preferred_element_type=jnp.float32) + b2
        o_ref[n:n + 1, :] = out_n.astype(o_ref.dtype)


# ----------------------------------------------------------------------------
# TaskPipeline forward: task_classifier(feature_extractor(x))
# ----------------------------------------------------------------------------
def task_pipeline_forward(x_nchw, params):
    n, cin, h, w = x_nchw.shape
    cout = params["conv_w"].shape[-1]
    hid = params["fc1_w"].shape[-1]
    ncls = params["fc2_w"].shape[-1]
    hw = h * w

    # ---- one-time layout prep (XLA glue, outside the kernel) ----
    # im2col, columns ordered (n, h, w), rows ordered (kh, kw, ci).
    x_nhwc = jnp.transpose(x_nchw, (0, 2, 3, 1))
    xp = jnp.pad(x_nhwc, ((0, 0), (1, 1), (1, 1), (0, 0)))
    taps = [xp[:, kh:kh + h, kw:kw + w, :].reshape(n * hw, cin)
            for kh in range(3) for kw in range(3)]
    patches_t = jnp.concatenate(taps, axis=1).T              # (9*Cin, N*HW)

    wct = params["conv_w"].reshape(9 * cin, cout).T          # (Cout, 9*Cin)
    bc = params["conv_b"].reshape(cout, 1)
    # fc1_w rows are in the NHWC (h, w, c) flatten order -> regroup per channel.
    w1p = params["fc1_w"].reshape(hw, cout, hid).transpose(1, 0, 2)  # (Cout,HW,HID)
    b1 = params["fc1_b"].reshape(1, hid)
    w2 = params["fc2_w"]
    b2 = params["fc2_b"].reshape(1, ncls)

    vmem = pl.BlockSpec(memory_space=pltpu.MemorySpace.VMEM)
    # NCLS=10 output is a masked (lane-sparse) store; negligible at this size.
    return pl.pallas_call(
        fused_pipeline_kernel,
        out_shape=jax.ShapeDtypeStruct((n, ncls), jnp.float32),
        in_specs=[vmem] * 7,
        out_specs=vmem,
        compiler_params=pltpu.CompilerParams(
            vmem_limit_bytes=32 * 1024 * 1024),
    )(patches_t, wct, bc, w1p, b1, w2, b2)


# Pure-JAX reference for a correctness check.
def reference_forward(x_nchw, params):
    x_nhwc = jnp.transpose(x_nchw, (0, 2, 3, 1))
    y = jax.lax.conv_general_dilated(
        x_nhwc, params["conv_w"], window_strides=(1, 1), padding="SAME",
        dimension_numbers=("NHWC", "HWIO", "NHWC"))
    y = jnp.maximum(y + params["conv_b"], 0.0)
    feat = y.reshape(y.shape[0], -1)
    hcur = jnp.maximum(feat @ params["fc1_w"] + params["fc1_b"], 0.0)
    return hcur @ params["fc2_w"] + params["fc2_b"]


if __name__ == "__main__":
    # Small shapes consistent with the module's forward.
    N, CIN, H, W = 2, 4, 16, 16
    COUT, HID, NCLS = 8, 32, 10
    FEAT = H * W * COUT

    key = jax.random.PRNGKey(0)
    kx, k1, k2, k3, k4, k5, k6 = jax.random.split(key, 7)

    x = jax.random.normal(kx, (N, CIN, H, W), dtype=jnp.float32)

    params = {
        "conv_w": jax.random.normal(k1, (3, 3, CIN, COUT), jnp.float32) * 0.1,
        "conv_b": jax.random.normal(k2, (COUT,), jnp.float32) * 0.1,
        "fc1_w": jax.random.normal(k3, (FEAT, HID), jnp.float32) * 0.05,
        "fc1_b": jax.random.normal(k4, (HID,), jnp.float32) * 0.05,
        "fc2_w": jax.random.normal(k5, (HID, NCLS), jnp.float32) * 0.05,
        "fc2_b": jax.random.normal(k6, (NCLS,), jnp.float32) * 0.05,
    }

    fwd = jax.jit(task_pipeline_forward)
    out = jax.block_until_ready(fwd(x, params))
    ref = jax.block_until_ready(reference_forward(x, params))

    assert out.shape == (N, NCLS)
    assert jnp.allclose(out, ref, atol=1e-4, rtol=1e-4), (
        f"mismatch: max abs err {jnp.max(jnp.abs(out - ref))}")
    print("KERNEL_OK")
</pallas_src>

<mosaic_0001>
module attributes {stable_mosaic.version = 11 : i64} {
  func.func @fused_pipeline_kernel(%arg0: memref<36x512xf32, #tpu.memory_space<vmem>>, %arg1: memref<8x36xf32, #tpu.memory_space<vmem>>, %arg2: memref<8x1xf32, #tpu.memory_space<vmem>>, %arg3: memref<8x256x32xf32, #tpu.memory_space<vmem>>, %arg4: memref<1x32xf32, #tpu.memory_space<vmem>>, %arg5: memref<32x10xf32, #tpu.memory_space<vmem>>, %arg6: memref<1x10xf32, #tpu.memory_space<vmem>>, %arg7: memref<2x10xf32, #tpu.memory_space<vmem>>) attributes {dimension_semantics = [], scalar_prefetch = 0 : i64, scratch_operands = 0 : i64, tpu.core_type = #tpu.core_type<tc>} {
    %c0 = arith.constant 0 : index
    %c0_0 = arith.constant 0 : index
    %0 = vector.load %arg1[%c0, %c0_0] : memref<8x36xf32, #tpu.memory_space<vmem>>, vector<8x36xf32>
    %c0_1 = arith.constant 0 : index
    %c0_2 = arith.constant 0 : index
    %1 = vector.load %arg0[%c0_1, %c0_2] : memref<36x512xf32, #tpu.memory_space<vmem>>, vector<36x512xf32>
    %cst = arith.constant dense<0.000000e+00> : vector<8x512xf32>
    %2 = tpu.matmul %0, %1, %cst {dimension_numbers = #tpu.dot_dimension_numbers<[1], [0], [0], [1], [0, 0, 1, 1], [], []>} : vector<8x36xf32>, vector<36x512xf32>, vector<8x512xf32> -> vector<8x512xf32>
    %c0_3 = arith.constant 0 : index
    %c0_4 = arith.constant 0 : index
    %3 = vector.load %arg2[%c0_3, %c0_4] : memref<8x1xf32, #tpu.memory_space<vmem>>, vector<8x1xf32>
    %4 = vector.broadcast %3 : vector<8x1xf32> to vector<8x512xf32>
    %5 = arith.addf %2, %4 : vector<8x512xf32>
    %cst_5 = arith.constant 0.000000e+00 : f32
    %6 = vector.broadcast %cst_5 : f32 to vector<8x512xf32>
    %7 = arith.maximumf %5, %6 : vector<8x512xf32>
    %c0_6 = arith.constant 0 : index
    %c0_7 = arith.constant 0 : index
    %8 = vector.load %arg4[%c0_6, %c0_7] : memref<1x32xf32, #tpu.memory_space<vmem>>, vector<1x32xf32>
    %c0_8 = arith.constant 0 : index
    %c0_9 = arith.constant 0 : index
    %c0_10 = arith.constant 0 : index
    %9 = vector.load %arg3[%c0_8, %c0_9, %c0_10] : memref<8x256x32xf32, #tpu.memory_space<vmem>>, vector<1x256x32xf32>
    %10 = vector.shape_cast %9 : vector<1x256x32xf32> to vector<256x32xf32>
    %11 = vector.extract_strided_slice %7 {offsets = [0, 0], sizes = [1, 512], strides = [1, 1]} : vector<8x512xf32> to vector<1x512xf32>
    %12 = vector.extract_strided_slice %11 {offsets = [0, 0], sizes = [1, 256], strides = [1, 1]} : vector<1x512xf32> to vector<1x256xf32>
    %cst_11 = arith.constant dense<0.000000e+00> : vector<1x32xf32>
    %13 = tpu.matmul %12, %10, %cst_11 {dimension_numbers = #tpu.dot_dimension_numbers<[1], [0], [0], [1], [0, 0, 1, 1], [], []>} : vector<1x256xf32>, vector<256x32xf32>, vector<1x32xf32> -> vector<1x32xf32>
    %14 = arith.addf %8, %13 : vector<1x32xf32>
    %15 = vector.extract_strided_slice %11 {offsets = [0, 256], sizes = [1, 256], strides = [1, 1]} : vector<1x512xf32> to vector<1x256xf32>
    %cst_12 = arith.constant dense<0.000000e+00> : vector<1x32xf32>
    %16 = tpu.matmul %15, %10, %cst_12 {dimension_numbers = #tpu.dot_dimension_numbers<[1], [0], [0], [1], [0, 0, 1, 1], [], []>} : vector<1x256xf32>, vector<256x32xf32>, vector<1x32xf32> -> vector<1x32xf32>
    %17 = arith.addf %8, %16 : vector<1x32xf32>
    %c1 = arith.constant 1 : index
    %c0_13 = arith.constant 0 : index
    %c0_14 = arith.constant 0 : index
    %18 = vector.load %arg3[%c1, %c0_13, %c0_14] : memref<8x256x32xf32, #tpu.memory_space<vmem>>, vector<1x256x32xf32>
    %19 = vector.shape_cast %18 : vector<1x256x32xf32> to vector<256x32xf32>
    %20 = vector.extract_strided_slice %7 {offsets = [1, 0], sizes = [1, 512], strides = [1, 1]} : vector<8x512xf32> to vector<1x512xf32>
    %21 = vector.extract_strided_slice %20 {offsets = [0, 0], sizes = [1, 256], strides = [1, 1]} : vector<1x512xf32> to vector<1x256xf32>
    %cst_15 = arith.constant dense<0.000000e+00> : vector<1x32xf32>
    %22 = tpu.matmul %21, %19, %cst_15 {dimension_numbers = #tpu.dot_dimension_numbers<[1], [0], [0], [1], [0, 0, 1, 1], [], []>} : vector<1x256xf32>, vector<256x32xf32>, vector<1x32xf32> -> vector<1x32xf32>
    %23 = arith.addf %14, %22 : vector<1x32xf32>
    %24 = vector.extract_strided_slice %20 {offsets = [0, 256], sizes = [1, 256], strides = [1, 1]} : vector<1x512xf32> to vector<1x256xf32>
    %cst_16 = arith.constant dense<0.000000e+00> : vector<1x32xf32>
    %25 = tpu.matmul %24, %19, %cst_16 {dimension_numbers = #tpu.dot_dimension_numbers<[1], [0], [0], [1], [0, 0, 1, 1], [], []>} : vector<1x256xf32>, vector<256x32xf32>, vector<1x32xf32> -> vector<1x32xf32>
    %26 = arith.addf %17, %25 : vector<1x32xf32>
    %c2 = arith.constant 2 : index
    %c0_17 = arith.constant 0 : index
    %c0_18 = arith.constant 0 : index
    %27 = vector.load %arg3[%c2, %c0_17, %c0_18] : memref<8x256x32xf32, #tpu.memory_space<vmem>>, vector<1x256x32xf32>
    %28 = vector.shape_cast %27 : vector<1x256x32xf32> to vector<256x32xf32>
    %29 = vector.extract_strided_slice %7 {offsets = [2, 0], sizes = [1, 512], strides = [1, 1]} : vector<8x512xf32> to vector<1x512xf32>
    %30 = vector.extract_strided_slice %29 {offsets = [0, 0], sizes = [1, 256], strides = [1, 1]} : vector<1x512xf32> to vector<1x256xf32>
    %cst_19 = arith.constant dense<0.000000e+00> : vector<1x32xf32>
    %31 = tpu.matmul %30, %28, %cst_19 {dimension_numbers = #tpu.dot_dimension_numbers<[1], [0], [0], [1], [0, 0, 1, 1], [], []>} : vector<1x256xf32>, vector<256x32xf32>, vector<1x32xf32> -> vector<1x32xf32>
    %32 = arith.addf %23, %31 : vector<1x32xf32>
    %33 = vector.extract_strided_slice %29 {offsets = [0, 256], sizes = [1, 256], strides = [1, 1]} : vector<1x512xf32> to vector<1x256xf32>
    %cst_20 = arith.constant dense<0.000000e+00> : vector<1x32xf32>
    %34 = tpu.matmul %33, %28, %cst_20 {dimension_numbers = #tpu.dot_dimension_numbers<[1], [0], [0], [1], [0, 0, 1, 1], [], []>} : vector<1x256xf32>, vector<256x32xf32>, vector<1x32xf32> -> vector<1x32xf32>
    %35 = arith.addf %26, %34 : vector<1x32xf32>
    %c3 = arith.constant 3 : index
    %c0_21 = arith.constant 0 : index
    %c0_22 = arith.constant 0 : index
    %36 = vector.load %arg3[%c3, %c0_21, %c0_22] : memref<8x256x32xf32, #tpu.memory_space<vmem>>, vector<1x256x32xf32>
    %37 = vector.shape_cast %36 : vector<1x256x32xf32> to vector<256x32xf32>
    %38 = vector.extract_strided_slice %7 {offsets = [3, 0], sizes = [1, 512], strides = [1, 1]} : vector<8x512xf32> to vector<1x512xf32>
    %39 = vector.extract_strided_slice %38 {offsets = [0, 0], sizes = [1, 256], strides = [1, 1]} : vector<1x512xf32> to vector<1x256xf32>
    %cst_23 = arith.constant dense<0.000000e+00> : vector<1x32xf32>
    %40 = tpu.matmul %39, %37, %cst_23 {dimension_numbers = #tpu.dot_dimension_numbers<[1], [0], [0], [1], [0, 0, 1, 1], [], []>} : vector<1x256xf32>, vector<256x32xf32>, vector<1x32xf32> -> vector<1x32xf32>
    %41 = arith.addf %32, %40 : vector<1x32xf32>
    %42 = vector.extract_strided_slice %38 {offsets = [0, 256], sizes = [1, 256], strides = [1, 1]} : vector<1x512xf32> to vector<1x256xf32>
    %cst_24 = arith.constant dense<0.000000e+00> : vector<1x32xf32>
    %43 = tpu.matmul %42, %37, %cst_24 {dimension_numbers = #tpu.dot_dimension_numbers<[1], [0], [0], [1], [0, 0, 1, 1], [], []>} : vector<1x256xf32>, vector<256x32xf32>, vector<1x32xf32> -> vector<1x32xf32>
    %44 = arith.addf %35, %43 : vector<1x32xf32>
    %c4 = arith.constant 4 : index
    %c0_25 = arith.constant 0 : index
    %c0_26 = arith.constant 0 : index
    %45 = vector.load %arg3[%c4, %c0_25, %c0_26] : memref<8x256x32xf32, #tpu.memory_space<vmem>>, vector<1x256x32xf32>
    %46 = vector.shape_cast %45 : vector<1x256x32xf32> to vector<256x32xf32>
    %47 = vector.extract_strided_slice %7 {offsets = [4, 0], sizes = [1, 512], strides = [1, 1]} : vector<8x512xf32> to vector<1x512xf32>
    %48 = vector.extract_strided_slice %47 {offsets = [0, 0], sizes = [1, 256], strides = [1, 1]} : vector<1x512xf32> to vector<1x256xf32>
    %cst_27 = arith.constant dense<0.000000e+00> : vector<1x32xf32>
    %49 = tpu.matmul %48, %46, %cst_27 {dimension_numbers = #tpu.dot_dimension_numbers<[1], [0], [0], [1], [0, 0, 1, 1], [], []>} : vector<1x256xf32>, vector<256x32xf32>, vector<1x32xf32> -> vector<1x32xf32>
    %50 = arith.addf %41, %49 : vector<1x32xf32>
    %51 = vector.extract_strided_slice %47 {offsets = [0, 256], sizes = [1, 256], strides = [1, 1]} : vector<1x512xf32> to vector<1x256xf32>
    %cst_28 = arith.constant dense<0.000000e+00> : vector<1x32xf32>
    %52 = tpu.matmul %51, %46, %cst_28 {dimension_numbers = #tpu.dot_dimension_numbers<[1], [0], [0], [1], [0, 0, 1, 1], [], []>} : vector<1x256xf32>, vector<256x32xf32>, vector<1x32xf32> -> vector<1x32xf32>
    %53 = arith.addf %44, %52 : vector<1x32xf32>
    %c5 = arith.constant 5 : index
    %c0_29 = arith.constant 0 : index
    %c0_30 = arith.constant 0 : index
    %54 = vector.load %arg3[%c5, %c0_29, %c0_30] : memref<8x256x32xf32, #tpu.memory_space<vmem>>, vector<1x256x32xf32>
    %55 = vector.shape_cast %54 : vector<1x256x32xf32> to vector<256x32xf32>
    %56 = vector.extract_strided_slice %7 {offsets = [5, 0], sizes = [1, 512], strides = [1, 1]} : vector<8x512xf32> to vector<1x512xf32>
    %57 = vector.extract_strided_slice %56 {offsets = [0, 0], sizes = [1, 256], strides = [1, 1]} : vector<1x512xf32> to vector<1x256xf32>
    %cst_31 = arith.constant dense<0.000000e+00> : vector<1x32xf32>
    %58 = tpu.matmul %57, %55, %cst_31 {dimension_numbers = #tpu.dot_dimension_numbers<[1], [0], [0], [1], [0, 0, 1, 1], [], []>} : vector<1x256xf32>, vector<256x32xf32>, vector<1x32xf32> -> vector<1x32xf32>
    %59 = arith.addf %50, %58 : vector<1x32xf32>
    %60 = vector.extract_strided_slice %56 {offsets = [0, 256], sizes = [1, 256], strides = [1, 1]} : vector<1x512xf32> to vector<1x256xf32>
    %cst_32 = arith.constant dense<0.000000e+00> : vector<1x32xf32>
    %61 = tpu.matmul %60, %55, %cst_32 {dimension_numbers = #tpu.dot_dimension_numbers<[1], [0], [0], [1], [0, 0, 1, 1], [], []>} : vector<1x256xf32>, vector<256x32xf32>, vector<1x32xf32> -> vector<1x32xf32>
    %62 = arith.addf %53, %61 : vector<1x32xf32>
    %c6 = arith.constant 6 : index
    %c0_33 = arith.constant 0 : index
    %c0_34 = arith.constant 0 : index
    %63 = vector.load %arg3[%c6, %c0_33, %c0_34] : memref<8x256x32xf32, #tpu.memory_space<vmem>>, vector<1x256x32xf32>
    %64 = vector.shape_cast %63 : vector<1x256x32xf32> to vector<256x32xf32>
    %65 = vector.extract_strided_slice %7 {offsets = [6, 0], sizes = [1, 512], strides = [1, 1]} : vector<8x512xf32> to vector<1x512xf32>
    %66 = vector.extract_strided_slice %65 {offsets = [0, 0], sizes = [1, 256], strides = [1, 1]} : vector<1x512xf32> to vector<1x256xf32>
    %cst_35 = arith.constant dense<0.000000e+00> : vector<1x32xf32>
    %67 = tpu.matmul %66, %64, %cst_35 {dimension_numbers = #tpu.dot_dimension_numbers<[1], [0], [0], [1], [0, 0, 1, 1], [], []>} : vector<1x256xf32>, vector<256x32xf32>, vector<1x32xf32> -> vector<1x32xf32>
    %68 = arith.addf %59, %67 : vector<1x32xf32>
    %69 = vector.extract_strided_slice %65 {offsets = [0, 256], sizes = [1, 256], strides = [1, 1]} : vector<1x512xf32> to vector<1x256xf32>
    %cst_36 = arith.constant dense<0.000000e+00> : vector<1x32xf32>
    %70 = tpu.matmul %69, %64, %cst_36 {dimension_numbers = #tpu.dot_dimension_numbers<[1], [0], [0], [1], [0, 0, 1, 1], [], []>} : vector<1x256xf32>, vector<256x32xf32>, vector<1x32xf32> -> vector<1x32xf32>
    %71 = arith.addf %62, %70 : vector<1x32xf32>
    %c7 = arith.constant 7 : index
    %c0_37 = arith.constant 0 : index
    %c0_38 = arith.constant 0 : index
    %72 = vector.load %arg3[%c7, %c0_37, %c0_38] : memref<8x256x32xf32, #tpu.memory_space<vmem>>, vector<1x256x32xf32>
    %73 = vector.shape_cast %72 : vector<1x256x32xf32> to vector<256x32xf32>
    %74 = vector.extract_strided_slice %7 {offsets = [7, 0], sizes = [1, 512], strides = [1, 1]} : vector<8x512xf32> to vector<1x512xf32>
    %75 = vector.extract_strided_slice %74 {offsets = [0, 0], sizes = [1, 256], strides = [1, 1]} : vector<1x512xf32> to vector<1x256xf32>
    %cst_39 = arith.constant dense<0.000000e+00> : vector<1x32xf32>
    %76 = tpu.matmul %75, %73, %cst_39 {dimension_numbers = #tpu.dot_dimension_numbers<[1], [0], [0], [1], [0, 0, 1, 1], [], []>} : vector<1x256xf32>, vector<256x32xf32>, vector<1x32xf32> -> vector<1x32xf32>
    %77 = arith.addf %68, %76 : vector<1x32xf32>
    %78 = vector.extract_strided_slice %74 {offsets = [0, 256], sizes = [1, 256], strides = [1, 1]} : vector<1x512xf32> to vector<1x256xf32>
    %cst_40 = arith.constant dense<0.000000e+00> : vector<1x32xf32>
    %79 = tpu.matmul %78, %73, %cst_40 {dimension_numbers = #tpu.dot_dimension_numbers<[1], [0], [0], [1], [0, 0, 1, 1], [], []>} : vector<1x256xf32>, vector<256x32xf32>, vector<1x32xf32> -> vector<1x32xf32>
    %80 = arith.addf %71, %79 : vector<1x32xf32>
    %c0_41 = arith.constant 0 : index
    %c0_42 = arith.constant 0 : index
    %81 = vector.load %arg5[%c0_41, %c0_42] : memref<32x10xf32, #tpu.memory_space<vmem>>, vector<32x10xf32>
    %c0_43 = arith.constant 0 : index
    %c0_44 = arith.constant 0 : index
    %82 = vector.load %arg6[%c0_43, %c0_44] : memref<1x10xf32, #tpu.memory_space<vmem>>, vector<1x10xf32>
    %cst_45 = arith.constant 0.000000e+00 : f32
    %83 = vector.broadcast %cst_45 : f32 to vector<1x32xf32>
    %84 = arith.maximumf %77, %83 : vector<1x32xf32>
    %cst_46 = arith.constant dense<0.000000e+00> : vector<1x10xf32>
    %85 = tpu.matmul %84, %81, %cst_46 {dimension_numbers = #tpu.dot_dimension_numbers<[1], [0], [0], [1], [0, 0, 1, 1], [], []>} : vector<1x32xf32>, vector<32x10xf32>, vector<1x10xf32> -> vector<1x10xf32>
    %86 = arith.addf %85, %82 : vector<1x10xf32>
    %c0_47 = arith.constant 0 : index
    %c0_48 = arith.constant 0 : index
    %87 = vector.load %arg7[%c0_47, %c0_48] : memref<2x10xf32, #tpu.memory_space<vmem>>, vector<1x10xf32>
    tpu.vector_store %arg7[%c0_47, %c0_48], %86 {strides = array<i32>} : memref<2x10xf32, #tpu.memory_space<vmem>>, vector<1x10xf32>,
    %cst_49 = arith.constant 0.000000e+00 : f32
    %88 = vector.broadcast %cst_49 : f32 to vector<1x32xf32>
    %89 = arith.maximumf %80, %88 : vector<1x32xf32>
    %cst_50 = arith.constant dense<0.000000e+00> : vector<1x10xf32>
    %90 = tpu.matmul %89, %81, %cst_50 {dimension_numbers = #tpu.dot_dimension_numbers<[1], [0], [0], [1], [0, 0, 1, 1], [], []>} : vector<1x32xf32>, vector<32x10xf32>, vector<1x10xf32> -> vector<1x10xf32>
    %91 = arith.addf %90, %82 : vector<1x10xf32>
    %c1_51 = arith.constant 1 : index
    %c0_52 = arith.constant 0 : index
    %92 = vector.load %arg7[%c1_51, %c0_52] : memref<2x10xf32, #tpu.memory_space<vmem>>, vector<1x10xf32>
    tpu.vector_store %arg7[%c1_51, %c0_52], %91 {strides = array<i32>} : memref<2x10xf32, #tpu.memory_space<vmem>>, vector<1x10xf32>,
    return
  }
}

</mosaic_0001>

<llo_original>
// kernel: task_pipeline_forward.1
$region0: #{task_pipeline_forward.1}
  #allocation0 [shape = 'u32[]', space=smem, size = 0x4, offset = 0x4, fixed_abs, tag = 'smem constant byte address 0x4 - core index']
  #allocation1 [shape = 'u32[144,128]{1,0:T(1,128)}', space=vmem, size = 0x12000, scoped, tag = 'internal scratch']
  %s0 = inlined_call_operand.vmem [shape: f32[36,512], index: 0, kind: input, shape index: {}]
  %s1 = inlined_call_operand.vmem [shape: f32[8,36], index: 1, kind: input, shape index: {}]
  %s2 = inlined_call_operand.vmem [shape: f32[8,1], index: 2, kind: input, shape index: {}]
  %s3 = inlined_call_operand.vmem [shape: f32[8,256,32], index: 3, kind: input, shape index: {}]
  %s4 = inlined_call_operand.vmem [shape: f32[1,32], index: 4, kind: input, shape index: {}]
  %s5 = inlined_call_operand.vmem [shape: f32[32,10], index: 5, kind: input, shape index: {}]
  %s6 = inlined_call_operand.vmem [shape: f32[1,10], index: 6, kind: input, shape index: {}]
  %s7 = inlined_call_operand.hbm [shape: f32[2,10], index: 7, kind: output, shape index: {}]
  %s8 = sld [smem:[#allocation0]]
  $region38: #{task_pipeline_forward.1} parent=0
    _
  %s10 = ssub.s32 1, %s8
  %s11 = scalar_select 0, %s10, %s8
  $region1: #{task_pipeline_forward.1} parent=0
    #allocation2 [shape = 'u8[1024]{0}', space=vmem, size = 0x400, scoped, tag = 'output window, operand 0, single buffered']
    #allocation3 [shape = 's32[1]{0}', space=sflag, size = 0x4, scoped, tag = 'scoped memory for task_pipeline_forward.1']
    %12 = vsyncpa [#allocation3], 0
    // Predicated region
    $region2: #{task_pipeline_forward.1} parent=1 // pred_check
      _
    $region3: #{task_pipeline_forward.1} parent=1 // pred_check_branch
      %14 = sbr.rel (0) target = $region5
    $region4: #{task_pipeline_forward.1} parent=1 // pred_region
      _
    $region5: #{task_pipeline_forward.1} parent=1 // pred_fallthru
      _
    // Predicated region
    $region6: #{task_pipeline_forward.1} parent=1 // pred_check
      _
    $region7: #{task_pipeline_forward.1} parent=1 // pred_check_branch
      %16 = sbr.rel (0) target = $region9
    $region8: #{task_pipeline_forward.1} parent=1 // pred_region
      _
    $region9: #{task_pipeline_forward.1} parent=1 // pred_fallthru
      _
    // Predicated region
    $region10: #{task_pipeline_forward.1} parent=1 // pred_check
      _
    $region11: #{task_pipeline_forward.1} parent=1 // pred_check_branch
      %18 = sbr.rel (0) target = $region13
    $region12: #{task_pipeline_forward.1} parent=1 // pred_region
      _
    $region13: #{task_pipeline_forward.1} parent=1 // pred_fallthru
      _
    // Predicated region
    $region14: #{task_pipeline_forward.1} parent=1 // pred_check
      _
    $region15: #{task_pipeline_forward.1} parent=1 // pred_check_branch
      %20 = sbr.rel (0) target = $region17
    $region16: #{task_pipeline_forward.1} parent=1 // pred_region
      _
    $region17: #{task_pipeline_forward.1} parent=1 // pred_fallthru
      _
    // Predicated region
    $region18: #{task_pipeline_forward.1} parent=1 // pred_check
      _
    $region19: #{task_pipeline_forward.1} parent=1 // pred_check_branch
      %22 = sbr.rel (0) target = $region21
    $region20: #{task_pipeline_forward.1} parent=1 // pred_region
      _
    $region21: #{task_pipeline_forward.1} parent=1 // pred_fallthru
      _
    // Predicated region
    $region22: #{task_pipeline_forward.1} parent=1 // pred_check
      _
    $region23: #{task_pipeline_forward.1} parent=1 // pred_check_branch
      %24 = sbr.rel (0) target = $region25
    $region24: #{task_pipeline_forward.1} parent=1 // pred_region
      _
    $region25: #{task_pipeline_forward.1} parent=1 // pred_fallthru
      _
    // Predicated region
    $region26: #{task_pipeline_forward.1} parent=1 // pred_check
      _
    $region27: #{task_pipeline_forward.1} parent=1 // pred_check_branch
      %26 = sbr.rel (0) target = $region29
    $region28: #{task_pipeline_forward.1} parent=1 // pred_region
      _
    $region29: #{task_pipeline_forward.1} parent=1 // pred_fallthru
      _
    %v27 = vld [vmem:[%s1] sm:$0xff]
    %v28 = vld [vmem:[%s0] sm:$0xff]
    %v29 = vld [vmem:[%s0 + $0x8] sm:$0xff]
    %v30 = vld [vmem:[%s0 + $0x10] sm:$0xff]
    %v31 = vld [vmem:[%s0 + $0x18] sm:$0xff]
    %v32 = vld [vmem:[%s0 + $0x20] sm:$0xff]
    %v33 = vld [vmem:[%s0 + $0x28] sm:$0xff]
    %v34 = vld [vmem:[%s0 + $0x30] sm:$0xff]
    %v35 = vld [vmem:[%s0 + $0x38] sm:$0xff]
    %v36 = vld [vmem:[%s0 + $0x40] sm:$0xff]
    %v37 = vld [vmem:[%s0 + $0x48] sm:$0xff]
    %v38 = vld [vmem:[%s0 + $0x50] sm:$0xff]
    %v39 = vld [vmem:[%s0 + $0x58] sm:$0xff]
    %v40 = vld [vmem:[%s0 + $0x60] sm:$0xff]
    %v41 = vld [vmem:[%s0 + $0x68] sm:$0xff]
    %v42 = vld [vmem:[%s0 + $0x70] sm:$0xff]
    %v43 = vld [vmem:[%s0 + $0x78] sm:$0xff]
    %v44 = vld [vmem:[%s0 + $0x80] sm:$0xf]
    %v45 = vld [vmem:[%s0 + $0x88] sm:$0xf]
    %v46 = vld [vmem:[%s0 + $0x90] sm:$0xf]
    %v47 = vld [vmem:[%s0 + $0x98] sm:$0xf]
    %v48 = vld [vmem:[%s2] sm:$0xff]
    %50 = vset.pattern.permute.xlu0 0
    %51 = vperm.xlu0 %50, %v48
    %v52 = vpop.permute.xlu0 %51
    %vm54 = vcmask 293888
    %v56 = vsel %vm54, %v27, 0
    %vm58 = vcmask 1043456
    %v60 = vsel %vm58, %v44, 0
    %v63 = vsel %vm58, %v45, 0
    %v66 = vsel %vm58, %v46, 0
    %v69 = vsel %vm58, %v47, 0
    %71 = vmatprep.subr.mxu0 %v29
    %72 = vmatpush1.msra.mxu0 %v28
    %73 = vmatprep.subr.mxu0 %v33
    %74 = vmatpush1.msra.mxu0 %v32
    %75 = vmatprep.subr.mxu0 %v37
    %76 = vmatpush1.msra.mxu0 %v36
    %77 = vmatprep.subr.mxu0 %v41
    %78 = vmatpush1.msra.mxu0 %v40
    %79 = vmatprep.subr.mxu0 %v63
    %80 = vmatpush1.msra.mxu0 %v60
    %81 = vmatprep.subr.mxu0 0.0
    %82 = vmatpush1.msra.mxu0 0.0
    %83 = vmatprep.subr.mxu0 0.0
    %84 = vmatpush1.msra.mxu0 0.0
    %85 = vmatprep.subr.mxu0 0.0
    %86 = vmatpush1.msra.mxu0 0.0
    %87 = vmatprep.subr.mxu0 0.0
    %88 = vmatpush1.msra.mxu0 0.0
    %89 = vmatprep.subr.mxu0 0.0
    %90 = vmatpush1.msra.mxu0 0.0
    %91 = vmatprep.subr.mxu0 0.0
    %92 = vmatpush1.msra.mxu0 0.0
    %93 = vmatprep.subr.mxu0 0.0
    %94 = vmatpush1.msra.mxu0 0.0
    %95 = vmatprep.subr.mxu0 0.0
    %96 = vmatpush1.msra.mxu0 0.0
    %97 = vmatprep.subr.mxu0 0.0
    %98 = vmatpush1.msra.mxu0 0.0
    %99 = vmatprep.subr.mxu0 0.0
    %100 = vmatpush1.msra.mxu0 0.0
    %101 = vmatprep.subr.mxu0 0.0
    %102 = vmatpush1.msra.mxu0 0.0
    %103 = vmatprep.subr.mxu0 0.0
    %104 = vmatpush1.msra.mxu0 0.0
    %105 = vmatprep.subr.mxu0 0.0
    %106 = vmatpush1.msra.mxu0 0.0
    %107 = vmatprep.subr.mxu0 0.0
    %108 = vmatpush1.msra.mxu0 0.0
    %109 = vmatprep.subr.mxu0 0.0
    %110 = vmatpush1.msra.mxu0 0.0
    %111 = vmatprep.subr.mxu0 0.0
    %112 = vmatpush1.msra.mxu0 0.0
    %113 = vmatprep.subr.mxu0 0.0
    %114 = vmatpush1.msra.mxu0 0.0
    %115 = vmatprep.subr.mxu0 0.0
    %116 = vmatpush1.msra.mxu0 0.0
    %117 = vmatprep.subr.mxu0 0.0
    %118 = vmatpush1.msra.mxu0 0.0
    %119 = vmatprep.subr.mxu0 0.0
    %120 = vmatpush1.msra.mxu0 0.0
    %121 = vmatprep.subr.mxu0 0.0
    %122 = vmatpush1.msra.mxu0 0.0
    %123 = vmatprep.subr.mxu0 0.0
    %124 = vmatpush1.msra.mxu0 0.0
    %125 = vmatprep.subr.mxu0 0.0
    %126 = vmatpush1.msra.mxu0 0.0
    %127 = vmatprep.subr.mxu0 0.0
    %128 = vmatpush1.msra.mxu0 0.0
    %129 = vmatprep.subr.mxu0 0.0
    %130 = vmatpush1.msra.mxu0 0.0
    %131 = vmatprep.subr.mxu0 0.0
    %132 = vmatpush1.msra.mxu0 0.0
    %133 = vmatprep.subr.mxu0 0.0
    %134 = vmatpush1.msra.mxu0 0.0
    %135 = vmatprep.mubr.f32.mxu0 0.0
    %136 = vmatmul.mubr.f32.gmra.mrb[0].mxu0 %v56
    %v137 = vpop.f32.mrb[0].mxu0
    %v138 = vadd.f32 %v52, %v137
    %v139 = vpop.f32.mrb[0].mxu0
    %v140 = vadd.f32 %v52, %v139
    %141 = vdwg.mxu0
    %142 = vmatprep.subr.mxu0 %v31
    %143 = vmatpush1.msra.mxu0 %v30
    %144 = vmatprep.subr.mxu0 %v35
    %145 = vmatpush1.msra.mxu0 %v34
    %146 = vmatprep.subr.mxu0 %v39
    %147 = vmatpush1.msra.mxu0 %v38
    %148 = vmatprep.subr.mxu0 %v43
    %149 = vmatpush1.msra.mxu0 %v42
    %150 = vmatprep.subr.mxu0 %v69
    %151 = vmatpush1.msra.mxu0 %v66
    %152 = vmatprep.subr.mxu0 0.0
    %153 = vmatpush1.msra.mxu0 0.0
    %154 = vmatprep.subr.mxu0 0.0
    %155 = vmatpush1.msra.mxu0 0.0
    %156 = vmatprep.subr.mxu0 0.0
    %157 = vmatpush1.msra.mxu0 0.0
    %158 = vmatprep.subr.mxu0 0.0
    %159 = vmatpush1.msra.mxu0 0.0
    %160 = vmatprep.subr.mxu0 0.0
    %161 = vmatpush1.msra.mxu0 0.0
    %162 = vmatprep.subr.mxu0 0.0
    %163 = vmatpush1.msra.mxu0 0.0
    %164 = vmatprep.subr.mxu0 0.0
    %165 = vmatpush1.msra.mxu0 0.0
    %166 = vmatprep.subr.mxu0 0.0
    %167 = vmatpush1.msra.mxu0 0.0
    %168 = vmatprep.subr.mxu0 0.0
    %169 = vmatpush1.msra.mxu0 0.0
    %170 = vmatprep.subr.mxu0 0.0
    %171 = vmatpush1.msra.mxu0 0.0
    %172 = vmatprep.subr.mxu0 0.0
    %173 = vmatpush1.msra.mxu0 0.0
    %174 = vmatprep.subr.mxu0 0.0
    %175 = vmatpush1.msra.mxu0 0.0
    %176 = vmatprep.subr.mxu0 0.0
    %177 = vmatpush1.msra.mxu0 0.0
    %178 = vmatprep.subr.mxu0 0.0
    %179 = vmatpush1.msra.mxu0 0.0
    %180 = vmatprep.subr.mxu0 0.0
    %181 = vmatpush1.msra.mxu0 0.0
    %182 = vmatprep.subr.mxu0 0.0
    %183 = vmatpush1.msra.mxu0 0.0
    %184 = vmatprep.subr.mxu0 0.0
    %185 = vmatpush1.msra.mxu0 0.0
    %186 = vmatprep.subr.mxu0 0.0
    %187 = vmatpush1.msra.mxu0 0.0
    %188 = vmatprep.subr.mxu0 0.0
    %189 = vmatpush1.msra.mxu0 0.0
    %190 = vmatprep.subr.mxu0 0.0
    %191 = vmatpush1.msra.mxu0 0.0
    %192 = vmatprep.subr.mxu0 0.0
    %193 = vmatpush1.msra.mxu0 0.0
    %194 = vmatprep.subr.mxu0 0.0
    %195 = vmatpush1.msra.mxu0 0.0
    %196 = vmatprep.subr.mxu0 0.0
    %197 = vmatpush1.msra.mxu0 0.0
    %198 = vmatprep.subr.mxu0 0.0
    %199 = vmatpush1.msra.mxu0 0.0
    %200 = vmatprep.subr.mxu0 0.0
    %201 = vmatpush1.msra.mxu0 0.0
    %202 = vmatprep.subr.mxu0 0.0
    %203 = vmatpush1.msra.mxu0 0.0
    %204 = vmatprep.subr.mxu0 0.0
    %205 = vmatpush1.msra.mxu0 0.0
    %206 = vmatprep.mubr.f32.mxu0 0.0
    %207 = vmatmul.mubr.f32.gmra.mrb[0].mxu0 %v56
    %v208 = vpop.f32.mrb[0].mxu0
    %v209 = vadd.f32 %v52, %v208
    %v210 = vpop.f32.mrb[0].mxu0
    %v211 = vadd.f32 %v52, %v210
    %212 = vdwg.mxu0
    %v213 = vmax.f32 %v138, 0.0
    %v214 = vmax.f32 %v140, 0.0
    %v215 = vmax.f32 %v209, 0.0
    %v216 = vmax.f32 %v211, 0.0
    %v217 = vld [vmem:[%s4] sm:$0x1]
    %v218 = vld [vmem:[%s3] sm:$0xff]
    %v219 = vld [vmem:[%s3 + $0x8] sm:$0xff]
    %v220 = vld [vmem:[%s3 + $0x10] sm:$0xff]
    %v221 = vld [vmem:[%s3 + $0x18] sm:$0xff]
    %v222 = vld [vmem:[%s3 + $0x20] sm:$0xff]
    %v223 = vld [vmem:[%s3 + $0x28] sm:$0xff]
    %v224 = vld [vmem:[%s3 + $0x30] sm:$0xff]
    %v225 = vld [vmem:[%s3 + $0x38] sm:$0xff]
    %v226 = vld [vmem:[%s3 + $0x40] sm:$0xff]
    %v227 = vld [vmem:[%s3 + $0x48] sm:$0xff]
    %v228 = vld [vmem:[%s3 + $0x50] sm:$0xff]
    %v229 = vld [vmem:[%s3 + $0x58] sm:$0xff]
    %v230 = vld [vmem:[%s3 + $0x60] sm:$0xff]
    %v231 = vld [vmem:[%s3 + $0x68] sm:$0xff]
    %v232 = vld [vmem:[%s3 + $0x70] sm:$0xff]
    %v233 = vld [vmem:[%s3 + $0x78] sm:$0xff]
    %v234 = vld [vmem:[%s3 + $0x80] sm:$0xff]
    %v235 = vld [vmem:[%s3 + $0x88] sm:$0xff]
    %v236 = vld [vmem:[%s3 + $0x90] sm:$0xff]
    %v237 = vld [vmem:[%s3 + $0x98] sm:$0xff]
    %v238 = vld [vmem:[%s3 + $0xa0] sm:$0xff]
    %v239 = vld [vmem:[%s3 + $0xa8] sm:$0xff]
    %v240 = vld [vmem:[%s3 + $0xb0] sm:$0xff]
    %v241 = vld [vmem:[%s3 + $0xb8] sm:$0xff]
    %v242 = vld [vmem:[%s3 + $0xc0] sm:$0xff]
    %v243 = vld [vmem:[%s3 + $0xc8] sm:$0xff]
    %v244 = vld [vmem:[%s3 + $0xd0] sm:$0xff]
    %v245 = vld [vmem:[%s3 + $0xd8] sm:$0xff]
    %v246 = vld [vmem:[%s3 + $0xe0] sm:$0xff]
    %v247 = vld [vmem:[%s3 + $0xe8] sm:$0xff]
    %v248 = vld [vmem:[%s3 + $0xf0] sm:$0xff]
    %v249 = vld [vmem:[%s3 + $0xf8] sm:$0xff]
    %250 = vmatprep.subr.mxu0 0.0
    %251 = vmatpush1.msra.mxu0 %v218
    %252 = vmatprep.subr.mxu0 0.0
    %253 = vmatpush1.msra.mxu0 %v219
    %254 = vmatprep.subr.mxu0 0.0
    %255 = vmatpush1.msra.mxu0 %v220
    %256 = vmatprep.subr.mxu0 0.0
    %257 = vmatpush1.msra.mxu0 %v221
    %258 = vmatprep.subr.mxu0 0.0
    %259 = vmatpush1.msra.mxu0 %v222
    %260 = vmatprep.subr.mxu0 0.0
    %261 = vmatpush1.msra.mxu0 %v223
    %262 = vmatprep.subr.mxu0 0.0
    %263 = vmatpush1.msra.mxu0 %v224
    %264 = vmatprep.subr.mxu0 0.0
    %265 = vmatpush1.msra.mxu0 %v225
    %266 = vmatprep.subr.mxu0 0.0
    %267 = vmatpush1.msra.mxu0 %v226
    %268 = vmatprep.subr.mxu0 0.0
    %269 = vmatpush1.msra.mxu0 %v227
    %270 = vmatprep.subr.mxu0 0.0
    %271 = vmatpush1.msra.mxu0 %v228
    %272 = vmatprep.subr.mxu0 0.0
    %273 = vmatpush1.msra.mxu0 %v229
    %274 = vmatprep.subr.mxu0 0.0
    %275 = vmatpush1.msra.mxu0 %v230
    %276 = vmatprep.subr.mxu0 0.0
    %277 = vmatpush1.msra.mxu0 %v231
    %278 = vmatprep.subr.mxu0 0.0
    %279 = vmatpush1.msra.mxu0 %v232
    %280 = vmatprep.subr.mxu0 0.0
    %281 = vmatpush1.msra.mxu0 %v233
    %282 = vmatprep.subr.mxu0 0.0
    %283 = vmatpush1.msra.mxu0 %v234
    %284 = vmatprep.subr.mxu0 0.0
    %285 = vmatpush1.msra.mxu0 %v235
    %286 = vmatprep.subr.mxu0 0.0
    %287 = vmatpush1.msra.mxu0 %v236
    %288 = vmatprep.subr.mxu0 0.0
    %289 = vmatpush1.msra.mxu0 %v237
    %290 = vmatprep.subr.mxu0 0.0
    %291 = vmatpush1.msra.mxu0 %v238
    %292 = vmatprep.subr.mxu0 0.0
    %293 = vmatpush1.msra.mxu0 %v239
    %294 = vmatprep.subr.mxu0 0.0
    %295 = vmatpush1.msra.mxu0 %v240
    %296 = vmatprep.subr.mxu0 0.0
    %297 = vmatpush1.msra.mxu0 %v241
    %298 = vmatprep.subr.mxu0 0.0
    %299 = vmatpush1.msra.mxu0 %v242
    %300 = vmatprep.subr.mxu0 0.0
    %301 = vmatpush1.msra.mxu0 %v243
    %302 = vmatprep.subr.mxu0 0.0
    %303 = vmatpush1.msra.mxu0 %v244
    %304 = vmatprep.subr.mxu0 0.0
    %305 = vmatpush1.msra.mxu0 %v245
    %306 = vmatprep.subr.mxu0 0.0
    %307 = vmatpush1.msra.mxu0 %v246
    %308 = vmatprep.subr.mxu0 0.0
    %309 = vmatpush1.msra.mxu0 %v247
    %310 = vmatprep.subr.mxu0 0.0
    %311 = vmatpush1.msra.mxu0 %v248
    %312 = vmatprep.subr.mxu0 0.0
    %313 = vmatpush1.msra.mxu0 %v249
    %314 = vmatprep.mubr.f32.mxu0 %v214
    %315 = vmatmul.mubr.f32.gmra.mrb[0].mxu0 %v213
    %v316 = vpop.f32.mrb[0].mxu0
    %v317 = vadd.f32 0.0, %v316
    %v318 = vpop.f32.mrb[0].mxu0
    %319 = vdwg.mxu0
    %v320 = vadd.f32 %v217, %v317
    %321 = vmatprep.subr.mxu0 0.0
    %322 = vmatpush1.msra.mxu0 %v218
    %323 = vmatprep.subr.mxu0 0.0
    %324 = vmatpush1.msra.mxu0 %v219
    %325 = vmatprep.subr.mxu0 0.0
    %326 = vmatpush1.msra.mxu0 %v220
    %327 = vmatprep.subr.mxu0 0.0
    %328 = vmatpush1.msra.mxu0 %v221
    %329 = vmatprep.subr.mxu0 0.0
    %330 = vmatpush1.msra.mxu0 %v222
    %331 = vmatprep.subr.mxu0 0.0
    %332 = vmatpush1.msra.mxu0 %v223
    %333 = vmatprep.subr.mxu0 0.0
    %334 = vmatpush1.msra.mxu0 %v224
    %335 = vmatprep.subr.mxu0 0.0
    %336 = vmatpush1.msra.mxu0 %v225
    %337 = vmatprep.subr.mxu0 0.0
    %338 = vmatpush1.msra.mxu0 %v226
    %339 = vmatprep.subr.mxu0 0.0
    %340 = vmatpush1.msra.mxu0 %v227
    %341 = vmatprep.subr.mxu0 0.0
    %342 = vmatpush1.msra.mxu0 %v228
    %343 = vmatprep.subr.mxu0 0.0
    %344 = vmatpush1.msra.mxu0 %v229
    %345 = vmatprep.subr.mxu0 0.0
    %346 = vmatpush1.msra.mxu0 %v230
    %347 = vmatprep.subr.mxu0 0.0
    %348 = vmatpush1.msra.mxu0 %v231
    %349 = vmatprep.subr.mxu0 0.0
    %350 = vmatpush1.msra.mxu0 %v232
    %351 = vmatprep.subr.mxu0 0.0
    %352 = vmatpush1.msra.mxu0 %v233
    %353 = vmatprep.subr.mxu0 0.0
    %354 = vmatpush1.msra.mxu0 %v234
    %355 = vmatprep.subr.mxu0 0.0
    %356 = vmatpush1.msra.mxu0 %v235
    %357 = vmatprep.subr.mxu0 0.0
    %358 = vmatpush1.msra.mxu0 %v236
    %359 = vmatprep.subr.mxu0 0.0
    %360 = vmatpush1.msra.mxu0 %v237
    %361 = vmatprep.subr.mxu0 0.0
    %362 = vmatpush1.msra.mxu0 %v238
    %363 = vmatprep.subr.mxu0 0.0
    %364 = vmatpush1.msra.mxu0 %v239
    %365 = vmatprep.subr.mxu0 0.0
    %366 = vmatpush1.msra.mxu0 %v240
    %367 = vmatprep.subr.mxu0 0.0
    %368 = vmatpush1.msra.mxu0 %v241
    %369 = vmatprep.subr.mxu0 0.0
    %370 = vmatpush1.msra.mxu0 %v242
    %371 = vmatprep.subr.mxu0 0.0
    %372 = vmatpush1.msra.mxu0 %v243
    %373 = vmatprep.subr.mxu0 0.0
    %374 = vmatpush1.msra.mxu0 %v244
    %375 = vmatprep.subr.mxu0 0.0
    %376 = vmatpush1.msra.mxu0 %v245
    %377 = vmatprep.subr.mxu0 0.0
    %378 = vmatpush1.msra.mxu0 %v246
    %379 = vmatprep.subr.mxu0 0.0
    %380 = vmatpush1.msra.mxu0 %v247
    %381 = vmatprep.subr.mxu0 0.0
    %382 = vmatpush1.msra.mxu0 %v248
    %383 = vmatprep.subr.mxu0 0.0
    %384 = vmatpush1.msra.mxu0 %v249
    %385 = vmatprep.mubr.f32.mxu0 %v216
    %386 = vmatmul.mubr.f32.gmra.mrb[0].mxu0 %v215
    %v387 = vpop.f32.mrb[0].mxu0
    %v388 = vadd.f32 0.0, %v387
    %v389 = vpop.f32.mrb[0].mxu0
    %390 = vdwg.mxu0
    %v391 = vadd.f32 %v217, %v388
    %s392 = scalar_lea.vmem %s3, 256
    %v393 = vld [vmem:[%s392] sm:$0xff]
    %v394 = vld [vmem:[%s392 + $0x8] sm:$0xff]
    %v395 = vld [vmem:[%s392 + $0x10] sm:$0xff]
    %v396 = vld [vmem:[%s392 + $0x18] sm:$0xff]
    %v397 = vld [vmem:[%s392 + $0x20] sm:$0xff]
    %v398 = vld [vmem:[%s392 + $0x28] sm:$0xff]
    %v399 = vld [vmem:[%s392 + $0x30] sm:$0xff]
    %v400 = vld [vmem:[%s392 + $0x38] sm:$0xff]
    %v401 = vld [vmem:[%s392 + $0x40] sm:$0xff]
    %v402 = vld [vmem:[%s392 + $0x48] sm:$0xff]
    %v403 = vld [vmem:[%s392 + $0x50] sm:$0xff]
    %v404 = vld [vmem:[%s392 + $0x58] sm:$0xff]
    %v405 = vld [vmem:[%s392 + $0x60] sm:$0xff]
    %v406 = vld [vmem:[%s392 + $0x68] sm:$0xff]
    %v407 = vld [vmem:[%s392 + $0x70] sm:$0xff]
    %v408 = vld [vmem:[%s392 + $0x78] sm:$0xff]
    %v409 = vld [vmem:[%s392 + $0x80] sm:$0xff]
    %v410 = vld [vmem:[%s392 + $0x88] sm:$0xff]
    %v411 = vld [vmem:[%s392 + $0x90] sm:$0xff]
    %v412 = vld [vmem:[%s392 + $0x98] sm:$0xff]
    %v413 = vld [vmem:[%s392 + $0xa0] sm:$0xff]
    %v414 = vld [vmem:[%s392 + $0xa8] sm:$0xff]
    %v415 = vld [vmem:[%s392 + $0xb0] sm:$0xff]
    %v416 = vld [vmem:[%s392 + $0xb8] sm:$0xff]
    %v417 = vld [vmem:[%s392 + $0xc0] sm:$0xff]
    %v418 = vld [vmem:[%s392 + $0xc8] sm:$0xff]
    %v419 = vld [vmem:[%s392 + $0xd0] sm:$0xff]
    %v420 = vld [vmem:[%s392 + $0xd8] sm:$0xff]
    %v421 = vld [vmem:[%s392 + $0xe0] sm:$0xff]
    %v422 = vld [vmem:[%s392 + $0xe8] sm:$0xff]
    %v423 = vld [vmem:[%s392 + $0xf0] sm:$0xff]
    %v424 = vld [vmem:[%s392 + $0xf8] sm:$0xff]
    %v427 = vrot.slane %v213, 1
    %v428 = vrot.slane %v214, 1
    %431 = vmatprep.subr.mxu0 0.0
    %432 = vmatpush1.msra.mxu0 %v393
    %433 = vmatprep.subr.mxu0 0.0
    %434 = vmatpush1.msra.mxu0 %v394
    %435 = vmatprep.subr.mxu0 0.0
    %436 = vmatpush1.msra.mxu0 %v395
    %437 = vmatprep.subr.mxu0 0.0
    %438 = vmatpush1.msra.mxu0 %v396
    %439 = vmatprep.subr.mxu0 0.0
    %440 = vmatpush1.msra.mxu0 %v397
    %441 = vmatprep.subr.mxu0 0.0
    %442 = vmatpush1.msra.mxu0 %v398
    %443 = vmatprep.subr.mxu0 0.0
    %444 = vmatpush1.msra.mxu0 %v399
    %445 = vmatprep.subr.mxu0 0.0
    %446 = vmatpush1.msra.mxu0 %v400
    %447 = vmatprep.subr.mxu0 0.0
    %448 = vmatpush1.msra.mxu0 %v401
    %449 = vmatprep.subr.mxu0 0.0
    %450 = vmatpush1.msra.mxu0 %v402
    %451 = vmatprep.subr.mxu0 0.0
    %452 = vmatpush1.msra.mxu0 %v403
    %453 = vmatprep.subr.mxu0 0.0
    %454 = vmatpush1.msra.mxu0 %v404
    %455 = vmatprep.subr.mxu0 0.0
    %456 = vmatpush1.msra.mxu0 %v405
    %457 = vmatprep.subr.mxu0 0.0
    %458 = vmatpush1.msra.mxu0 %v406
    %459 = vmatprep.subr.mxu0 0.0
    %460 = vmatpush1.msra.mxu0 %v407
    %461 = vmatprep.subr.mxu0 0.0
    %462 = vmatpush1.msra.mxu0 %v408
    %463 = vmatprep.subr.mxu0 0.0
    %464 = vmatpush1.msra.mxu0 %v409
    %465 = vmatprep.subr.mxu0 0.0
    %466 = vmatpush1.msra.mxu0 %v410
    %467 = vmatprep.subr.mxu0 0.0
    %468 = vmatpush1.msra.mxu0 %v411
    %469 = vmatprep.subr.mxu0 0.0
    %470 = vmatpush1.msra.mxu0 %v412
    %471 = vmatprep.subr.mxu0 0.0
    %472 = vmatpush1.msra.mxu0 %v413
    %473 = vmatprep.subr.mxu0 0.0
    %474 = vmatpush1.msra.mxu0 %v414
    %475 = vmatprep.subr.mxu0 0.0
    %476 = vmatpush1.msra.mxu0 %v415
    %477 = vmatprep.subr.mxu0 0.0
    %478 = vmatpush1.msra.mxu0 %v416
    %479 = vmatprep.subr.mxu0 0.0
    %480 = vmatpush1.msra.mxu0 %v417
    %481 = vmatprep.subr.mxu0 0.0
    %482 = vmatpush1.msra.mxu0 %v418
    %483 = vmatprep.subr.mxu0 0.0
    %484 = vmatpush1.msra.mxu0 %v419
    %485 = vmatprep.subr.mxu0 0.0
    %486 = vmatpush1.msra.mxu0 %v420
    %487 = vmatprep.subr.mxu0 0.0
    %488 = vmatpush1.msra.mxu0 %v421
    %489 = vmatprep.subr.mxu0 0.0
    %490 = vmatpush1.msra.mxu0 %v422
    %491 = vmatprep.subr.mxu0 0.0
    %492 = vmatpush1.msra.mxu0 %v423
    %493 = vmatprep.subr.mxu0 0.0
    %494 = vmatpush1.msra.mxu0 %v424
    %495 = vmatprep.mubr.f32.mxu0 %v428
    %496 = vmatmul.mubr.f32.gmra.mrb[0].mxu0 %v427
    %v497 = vpop.f32.mrb[0].mxu0
    %v498 = vadd.f32 0.0, %v497
    %v499 = vpop.f32.mrb[0].mxu0
    %500 = vdwg.mxu0
    %v501 = vadd.f32 %v320, %v498
    %v504 = vrot.slane %v215, 1
    %v505 = vrot.slane %v216, 1
    %508 = vmatprep.subr.mxu0 0.0
    %509 = vmatpush1.msra.mxu0 %v393
    %510 = vmatprep.subr.mxu0 0.0
    %511 = vmatpush1.msra.mxu0 %v394
    %512 = vmatprep.subr.mxu0 0.0
    %513 = vmatpush1.msra.mxu0 %v395
    %514 = vmatprep.subr.mxu0 0.0
    %515 = vmatpush1.msra.mxu0 %v396
    %516 = vmatprep.subr.mxu0 0.0
    %517 = vmatpush1.msra.mxu0 %v397
    %518 = vmatprep.subr.mxu0 0.0
    %519 = vmatpush1.msra.mxu0 %v398
    %520 = vmatprep.subr.mxu0 0.0
    %521 = vmatpush1.msra.mxu0 %v399
    %522 = vmatprep.subr.mxu0 0.0
    %523 = vmatpush1.msra.mxu0 %v400
    %524 = vmatprep.subr.mxu0 0.0
    %525 = vmatpush1.msra.mxu0 %v401
    %526 = vmatprep.subr.mxu0 0.0
    %527 = vmatpush1.msra.mxu0 %v402
    %528 = vmatprep.subr.mxu0 0.0
    %529 = vmatpush1.msra.mxu0 %v403
    %530 = vmatprep.subr.mxu0 0.0
    %531 = vmatpush1.msra.mxu0 %v404
    %532 = vmatprep.subr.mxu0 0.0
    %533 = vmatpush1.msra.mxu0 %v405
    %534 = vmatprep.subr.mxu0 0.0
    %535 = vmatpush1.msra.mxu0 %v406
    %536 = vmatprep.subr.mxu0 0.0
    %537 = vmatpush1.msra.mxu0 %v407
    %538 = vmatprep.subr.mxu0 0.0
    %539 = vmatpush1.msra.mxu0 %v408
    %540 = vmatprep.subr.mxu0 0.0
    %541 = vmatpush1.msra.mxu0 %v409
    %542 = vmatprep.subr.mxu0 0.0
    %543 = vmatpush1.msra.mxu0 %v410
    %544 = vmatprep.subr.mxu0 0.0
    %545 = vmatpush1.msra.mxu0 %v411
    %546 = vmatprep.subr.mxu0 0.0
    %547 = vmatpush1.msra.mxu0 %v412
    %548 = vmatprep.subr.mxu0 0.0
    %549 = vmatpush1.msra.mxu0 %v413
    %550 = vmatprep.subr.mxu0 0.0
    %551 = vmatpush1.msra.mxu0 %v414
    %552 = vmatprep.subr.mxu0 0.0
    %553 = vmatpush1.msra.mxu0 %v415
    %554 = vmatprep.subr.mxu0 0.0
    %555 = vmatpush1.msra.mxu0 %v416
    %556 = vmatprep.subr.mxu0 0.0
    %557 = vmatpush1.msra.mxu0 %v417
    %558 = vmatprep.subr.mxu0 0.0
    %559 = vmatpush1.msra.mxu0 %v418
    %560 = vmatprep.subr.mxu0 0.0
    %561 = vmatpush1.msra.mxu0 %v419
    %562 = vmatprep.subr.mxu0 0.0
    %563 = vmatpush1.msra.mxu0 %v420
    %564 = vmatprep.subr.mxu0 0.0
    %565 = vmatpush1.msra.mxu0 %v421
    %566 = vmatprep.subr.mxu0 0.0
    %567 = vmatpush1.msra.mxu0 %v422
    %568 = vmatprep.subr.mxu0 0.0
    %569 = vmatpush1.msra.mxu0 %v423
    %570 = vmatprep.subr.mxu0 0.0
    %571 = vmatpush1.msra.mxu0 %v424
    %572 = vmatprep.mubr.f32.mxu0 %v505
    %573 = vmatmul.mubr.f32.gmra.mrb[0].mxu0 %v504
    %v574 = vpop.f32.mrb[0].mxu0
    %v575 = vadd.f32 0.0, %v574
    %v576 = vpop.f32.mrb[0].mxu0
    %577 = vdwg.mxu0
    %v578 = vadd.f32 %v391, %v575
    %s579 = scalar_lea.vmem %s3, 512
    %v580 = vld [vmem:[%s579] sm:$0xff]
    %v581 = vld [vmem:[%s579 + $0x8] sm:$0xff]
    %v582 = vld [vmem:[%s579 + $0x10] sm:$0xff]
    %v583 = vld [vmem:[%s579 + $0x18] sm:$0xff]
    %v584 = vld [vmem:[%s579 + $0x20] sm:$0xff]
    %v585 = vld [vmem:[%s579 + $0x28] sm:$0xff]
    %v586 = vld [vmem:[%s579 + $0x30] sm:$0xff]
    %v587 = vld [vmem:[%s579 + $0x38] sm:$0xff]
    %v588 = vld [vmem:[%s579 + $0x40] sm:$0xff]
    %v589 = vld [vmem:[%s579 + $0x48] sm:$0xff]
    %v590 = vld [vmem:[%s579 + $0x50] sm:$0xff]
    %v591 = vld [vmem:[%s579 + $0x58] sm:$0xff]
    %v592 = vld [vmem:[%s579 + $0x60] sm:$0xff]
    %v593 = vld [vmem:[%s579 + $0x68] sm:$0xff]
    %v594 = vld [vmem:[%s579 + $0x70] sm:$0xff]
    %v595 = vld [vmem:[%s579 + $0x78] sm:$0xff]
    %v596 = vld [vmem:[%s579 + $0x80] sm:$0xff]
    %v597 = vld [vmem:[%s579 + $0x88] sm:$0xff]
    %v598 = vld [vmem:[%s579 + $0x90] sm:$0xff]
    %v599 = vld [vmem:[%s579 + $0x98] sm:$0xff]
    %v600 = vld [vmem:[%s579 + $0xa0] sm:$0xff]
    %v601 = vld [vmem:[%s579 + $0xa8] sm:$0xff]
    %v602 = vld [vmem:[%s579 + $0xb0] sm:$0xff]
    %v603 = vld [vmem:[%s579 + $0xb8] sm:$0xff]
    %v604 = vld [vmem:[%s579 + $0xc0] sm:$0xff]
    %v605 = vld [vmem:[%s579 + $0xc8] sm:$0xff]
    %v606 = vld [vmem:[%s579 + $0xd0] sm:$0xff]
    %v607 = vld [vmem:[%s579 + $0xd8] sm:$0xff]
    %v608 = vld [vmem:[%s579 + $0xe0] sm:$0xff]
    %v609 = vld [vmem:[%s579 + $0xe8] sm:$0xff]
    %v610 = vld [vmem:[%s579 + $0xf0] sm:$0xff]
    %v611 = vld [vmem:[%s579 + $0xf8] sm:$0xff]
    %v612 = vrot.slane %v213, 2
    %v613 = vrot.slane %v214, 2
    %616 = vmatprep.subr.mxu0 0.0
    %617 = vmatpush1.msra.mxu0 %v580
    %618 = vmatprep.subr.mxu0 0.0
    %619 = vmatpush1.msra.mxu0 %v581
    %620 = vmatprep.subr.mxu0 0.0
    %621 = vmatpush1.msra.mxu0 %v582
    %622 = vmatprep.subr.mxu0 0.0
    %623 = vmatpush1.msra.mxu0 %v583
    %624 = vmatprep.subr.mxu0 0.0
    %625 = vmatpush1.msra.mxu0 %v584
    %626 = vmatprep.subr.mxu0 0.0
    %627 = vmatpush1.msra.mxu0 %v585
    %628 = vmatprep.subr.mxu0 0.0
    %629 = vmatpush1.msra.mxu0 %v586
    %630 = vmatprep.subr.mxu0 0.0
    %631 = vmatpush1.msra.mxu0 %v587
    %632 = vmatprep.subr.mxu0 0.0
    %633 = vmatpush1.msra.mxu0 %v588
    %634 = vmatprep.subr.mxu0 0.0
    %635 = vmatpush1.msra.mxu0 %v589
    %636 = vmatprep.subr.mxu0 0.0
    %637 = vmatpush1.msra.mxu0 %v590
    %638 = vmatprep.subr.mxu0 0.0
    %639 = vmatpush1.msra.mxu0 %v591
    %640 = vmatprep.subr.mxu0 0.0
    %641 = vmatpush1.msra.mxu0 %v592
    %642 = vmatprep.subr.mxu0 0.0
    %643 = vmatpush1.msra.mxu0 %v593
    %644 = vmatprep.subr.mxu0 0.0
    %645 = vmatpush1.msra.mxu0 %v594
    %646 = vmatprep.subr.mxu0 0.0
    %647 = vmatpush1.msra.mxu0 %v595
    %648 = vmatprep.subr.mxu0 0.0
    %649 = vmatpush1.msra.mxu0 %v596
    %650 = vmatprep.subr.mxu0 0.0
    %651 = vmatpush1.msra.mxu0 %v597
    %652 = vmatprep.subr.mxu0 0.0
    %653 = vmatpush1.msra.mxu0 %v598
    %654 = vmatprep.subr.mxu0 0.0
    %655 = vmatpush1.msra.mxu0 %v599
    %656 = vmatprep.subr.mxu0 0.0
    %657 = vmatpush1.msra.mxu0 %v600
    %658 = vmatprep.subr.mxu0 0.0
    %659 = vmatpush1.msra.mxu0 %v601
    %660 = vmatprep.subr.mxu0 0.0
    %661 = vmatpush1.msra.mxu0 %v602
    %662 = vmatprep.subr.mxu0 0.0
    %663 = vmatpush1.msra.mxu0 %v603
    %664 = vmatprep.subr.mxu0 0.0
    %665 = vmatpush1.msra.mxu0 %v604
    %666 = vmatprep.subr.mxu0 0.0
    %667 = vmatpush1.msra.mxu0 %v605
    %668 = vmatprep.subr.mxu0 0.0
    %669 = vmatpush1.msra.mxu0 %v606
    %670 = vmatprep.subr.mxu0 0.0
    %671 = vmatpush1.msra.mxu0 %v607
    %672 = vmatprep.subr.mxu0 0.0
    %673 = vmatpush1.msra.mxu0 %v608
    %674 = vmatprep.subr.mxu0 0.0
    %675 = vmatpush1.msra.mxu0 %v609
    %676 = vmatprep.subr.mxu0 0.0
    %677 = vmatpush1.msra.mxu0 %v610
    %678 = vmatprep.subr.mxu0 0.0
    %679 = vmatpush1.msra.mxu0 %v611
    %680 = vmatprep.mubr.f32.mxu0 %v613
    %681 = vmatmul.mubr.f32.gmra.mrb[0].mxu0 %v612
    %v682 = vpop.f32.mrb[0].mxu0
    %v683 = vadd.f32 0.0, %v682
    %v684 = vpop.f32.mrb[0].mxu0
    %685 = vdwg.mxu0
    %v686 = vadd.f32 %v501, %v683
    %v687 = vrot.slane %v215, 2
    %v688 = vrot.slane %v216, 2
    %691 = vmatprep.subr.mxu0 0.0
    %692 = vmatpush1.msra.mxu0 %v580
    %693 = vmatprep.subr.mxu0 0.0
    %694 = vmatpush1.msra.mxu0 %v581
    %695 = vmatprep.subr.mxu0 0.0
    %696 = vmatpush1.msra.mxu0 %v582
    %697 = vmatprep.subr.mxu0 0.0
    %698 = vmatpush1.msra.mxu0 %v583
    %699 = vmatprep.subr.mxu0 0.0
    %700 = vmatpush1.msra.mxu0 %v584
    %701 = vmatprep.subr.mxu0 0.0
    %702 = vmatpush1.msra.mxu0 %v585
    %703 = vmatprep.subr.mxu0 0.0
    %704 = vmatpush1.msra.mxu0 %v586
    %705 = vmatprep.subr.mxu0 0.0
    %706 = vmatpush1.msra.mxu0 %v587
    %707 = vmatprep.subr.mxu0 0.0
    %708 = vmatpush1.msra.mxu0 %v588
    %709 = vmatprep.subr.mxu0 0.0
    %710 = vmatpush1.msra.mxu0 %v589
    %711 = vmatprep.subr.mxu0 0.0
    %712 = vmatpush1.msra.mxu0 %v590
    %713 = vmatprep.subr.mxu0 0.0
    %714 = vmatpush1.msra.mxu0 %v591
    %715 = vmatprep.subr.mxu0 0.0
    %716 = vmatpush1.msra.mxu0 %v592
    %717 = vmatprep.subr.mxu0 0.0
    %718 = vmatpush1.msra.mxu0 %v593
    %719 = vmatprep.subr.mxu0 0.0
    %720 = vmatpush1.msra.mxu0 %v594
    %721 = vmatprep.subr.mxu0 0.0
    %722 = vmatpush1.msra.mxu0 %v595
    %723 = vmatprep.subr.mxu0 0.0
    %724 = vmatpush1.msra.mxu0 %v596
    %725 = vmatprep.subr.mxu0 0.0
    %726 = vmatpush1.msra.mxu0 %v597
    %727 = vmatprep.subr.mxu0 0.0
    %728 = vmatpush1.msra.mxu0 %v598
    %729 = vmatprep.subr.mxu0 0.0
    %730 = vmatpush1.msra.mxu0 %v599
    %731 = vmatprep.subr.mxu0 0.0
    %732 = vmatpush1.msra.mxu0 %v600
    %733 = vmatprep.subr.mxu0 0.0
    %734 = vmatpush1.msra.mxu0 %v601
    %735 = vmatprep.subr.mxu0 0.0
    %736 = vmatpush1.msra.mxu0 %v602
    %737 = vmatprep.subr.mxu0 0.0
    %738 = vmatpush1.msra.mxu0 %v603
    %739 = vmatprep.subr.mxu0 0.0
    %740 = vmatpush1.msra.mxu0 %v604
    %741 = vmatprep.subr.mxu0 0.0
    %742 = vmatpush1.msra.mxu0 %v605
    %743 = vmatprep.subr.mxu0 0.0
    %744 = vmatpush1.msra.mxu0 %v606
    %745 = vmatprep.subr.mxu0 0.0
    %746 = vmatpush1.msra.mxu0 %v607
    %747 = vmatprep.subr.mxu0 0.0
    %748 = vmatpush1.msra.mxu0 %v608
    %749 = vmatprep.subr.mxu0 0.0
    %750 = vmatpush1.msra.mxu0 %v609
    %751 = vmatprep.subr.mxu0 0.0
    %752 = vmatpush1.msra.mxu0 %v610
    %753 = vmatprep.subr.mxu0 0.0
    %754 = vmatpush1.msra.mxu0 %v611
    %755 = vmatprep.mubr.f32.mxu0 %v688
    %756 = vmatmul.mubr.f32.gmra.mrb[0].mxu0 %v687
    %v757 = vpop.f32.mrb[0].mxu0
    %v758 = vadd.f32 0.0, %v757
    %v759 = vpop.f32.mrb[0].mxu0
    %760 = vdwg.mxu0
    %v761 = vadd.f32 %v578, %v758
    %s762 = scalar_lea.vmem %s3, 768
    %v763 = vld [vmem:[%s762] sm:$0xff]
    %v764 = vld [vmem:[%s762 + $0x8] sm:$0xff]
    %v765 = vld [vmem:[%s762 + $0x10] sm:$0xff]
    %v766 = vld [vmem:[%s762 + $0x18] sm:$0xff]
    %v767 = vld [vmem:[%s762 + $0x20] sm:$0xff]
    %v768 = vld [vmem:[%s762 + $0x28] sm:$0xff]
    %v769 = vld [vmem:[%s762 + $0x30] sm:$0xff]
    %v770 = vld [vmem:[%s762 + $0x38] sm:$0xff]
    %v771 = vld [vmem:[%s762 + $0x40] sm:$0xff]
    %v772 = vld [vmem:[%s762 + $0x48] sm:$0xff]
    %v773 = vld [vmem:[%s762 + $0x50] sm:$0xff]
    %v774 = vld [vmem:[%s762 + $0x58] sm:$0xff]
    %v775 = vld [vmem:[%s762 + $0x60] sm:$0xff]
    %v776 = vld [vmem:[%s762 + $0x68] sm:$0xff]
    %v777 = vld [vmem:[%s762 + $0x70] sm:$0xff]
    %v778 = vld [vmem:[%s762 + $0x78] sm:$0xff]
    %v779 = vld [vmem:[%s762 + $0x80] sm:$0xff]
    %v780 = vld [vmem:[%s762 + $0x88] sm:$0xff]
    %v781 = vld [vmem:[%s762 + $0x90] sm:$0xff]
    %v782 = vld [vmem:[%s762 + $0x98] sm:$0xff]
    %v783 = vld [vmem:[%s762 + $0xa0] sm:$0xff]
    %v784 = vld [vmem:[%s762 + $0xa8] sm:$0xff]
    %v785 = vld [vmem:[%s762 + $0xb0] sm:$0xff]
    %v786 = vld [vmem:[%s762 + $0xb8] sm:$0xff]
    %v787 = vld [vmem:[%s762 + $0xc0] sm:$0xff]
    %v788 = vld [vmem:[%s762 + $0xc8] sm:$0xff]
    %v789 = vld [vmem:[%s762 + $0xd0] sm:$0xff]
    %v790 = vld [vmem:[%s762 + $0xd8] sm:$0xff]
    %v791 = vld [vmem:[%s762 + $0xe0] sm:$0xff]
    %v792 = vld [vmem:[%s762 + $0xe8] sm:$0xff]
    %v793 = vld [vmem:[%s762 + $0xf0] sm:$0xff]
    %v794 = vld [vmem:[%s762 + $0xf8] sm:$0xff]
    %v795 = vrot.slane %v213, 3
    %v796 = vrot.slane %v214, 3
    %799 = vmatprep.subr.mxu0 0.0
    %800 = vmatpush1.msra.mxu0 %v763
    %801 = vmatprep.subr.mxu0 0.0
    %802 = vmatpush1.msra.mxu0 %v764
    %803 = vmatprep.subr.mxu0 0.0
    %804 = vmatpush1.msra.mxu0 %v765
    %805 = vmatprep.subr.mxu0 0.0
    %806 = vmatpush1.msra.mxu0 %v766
    %807 = vmatprep.subr.mxu0 0.0
    %808 = vmatpush1.msra.mxu0 %v767
    %809 = vmatprep.subr.mxu0 0.0
    %810 = vmatpush1.msra.mxu0 %v768
    %811 = vmatprep.subr.mxu0 0.0
    %812 = vmatpush1.msra.mxu0 %v769
    %813 = vmatprep.subr.mxu0 0.0
    %814 = vmatpush1.msra.mxu0 %v770
    %815 = vmatprep.subr.mxu0 0.0
    %816 = vmatpush1.msra.mxu0 %v771
    %817 = vmatprep.subr.mxu0 0.0
    %818 = vmatpush1.msra.mxu0 %v772
    %819 = vmatprep.subr.mxu0 0.0
    %820 = vmatpush1.msra.mxu0 %v773
    %821 = vmatprep.subr.mxu0 0.0
    %822 = vmatpush1.msra.mxu0 %v774
    %823 = vmatprep.subr.mxu0 0.0
    %824 = vmatpush1.msra.mxu0 %v775
    %825 = vmatprep.subr.mxu0 0.0
    %826 = vmatpush1.msra.mxu0 %v776
    %827 = vmatprep.subr.mxu0 0.0
    %828 = vmatpush1.msra.mxu0 %v777
    %829 = vmatprep.subr.mxu0 0.0
    %830 = vmatpush1.msra.mxu0 %v778
    %831 = vmatprep.subr.mxu0 0.0
    %832 = vmatpush1.msra.mxu0 %v779
    %833 = vmatprep.subr.mxu0 0.0
    %834 = vmatpush1.msra.mxu0 %v780
    %835 = vmatprep.subr.mxu0 0.0
    %836 = vmatpush1.msra.mxu0 %v781
    %837 = vmatprep.subr.mxu0 0.0
    %838 = vmatpush1.msra.mxu0 %v782
    %839 = vmatprep.subr.mxu0 0.0
    %840 = vmatpush1.msra.mxu0 %v783
    %841 = vmatprep.subr.mxu0 0.0
    %842 = vmatpush1.msra.mxu0 %v784
    %843 = vmatprep.subr.mxu0 0.0
    %844 = vmatpush1.msra.mxu0 %v785
    %845 = vmatprep.subr.mxu0 0.0
    %846 = vmatpush1.msra.mxu0 %v786
    %847 = vmatprep.subr.mxu0 0.0
    %848 = vmatpush1.msra.mxu0 %v787
    %849 = vmatprep.subr.mxu0 0.0
    %850 = vmatpush1.msra.mxu0 %v788
    %851 = vmatprep.subr.mxu0 0.0
    %852 = vmatpush1.msra.mxu0 %v789
    %853 = vmatprep.subr.mxu0 0.0
    %854 = vmatpush1.msra.mxu0 %v790
    %855 = vmatprep.subr.mxu0 0.0
    %856 = vmatpush1.msra.mxu0 %v791
    %857 = vmatprep.subr.mxu0 0.0
    %858 = vmatpush1.msra.mxu0 %v792
    %859 = vmatprep.subr.mxu0 0.0
    %860 = vmatpush1.msra.mxu0 %v793
    %861 = vmatprep.subr.mxu0 0.0
    %862 = vmatpush1.msra.mxu0 %v794
    %863 = vmatprep.mubr.f32.mxu0 %v796
    %864 = vmatmul.mubr.f32.gmra.mrb[0].mxu0 %v795
    %v865 = vpop.f32.mrb[0].mxu0
    %v866 = vadd.f32 0.0, %v865
    %v867 = vpop.f32.mrb[0].mxu0
    %868 = vdwg.mxu0
    %v869 = vadd.f32 %v686, %v866
    %v870 = vrot.slane %v215, 3
    %v871 = vrot.slane %v216, 3
    %874 = vmatprep.subr.mxu0 0.0
    %875 = vmatpush1.msra.mxu0 %v763
    %876 = vmatprep.subr.mxu0 0.0
    %877 = vmatpush1.msra.mxu0 %v764
    %878 = vmatprep.subr.mxu0 0.0
    %879 = vmatpush1.msra.mxu0 %v765
    %880 = vmatprep.subr.mxu0 0.0
    %881 = vmatpush1.msra.mxu0 %v766
    %882 = vmatprep.subr.mxu0 0.0
    %883 = vmatpush1.msra.mxu0 %v767
    %884 = vmatprep.subr.mxu0 0.0
    %885 = vmatpush1.msra.mxu0 %v768
    %886 = vmatprep.subr.mxu0 0.0
    %887 = vmatpush1.msra.mxu0 %v769
    %888 = vmatprep.subr.mxu0 0.0
    %889 = vmatpush1.msra.mxu0 %v770
    %890 = vmatprep.subr.mxu0 0.0
    %891 = vmatpush1.msra.mxu0 %v771
    %892 = vmatprep.subr.mxu0 0.0
    %893 = vmatpush1.msra.mxu0 %v772
    %894 = vmatprep.subr.mxu0 0.0
    %895 = vmatpush1.msra.mxu0 %v773
    %896 = vmatprep.subr.mxu0 0.0
    %897 = vmatpush1.msra.mxu0 %v774
    %898 = vmatprep.subr.mxu0 0.0
    %899 = vmatpush1.msra.mxu0 %v775
    %900 = vmatprep.subr.mxu0 0.0
    %901 = vmatpush1.msra.mxu0 %v776
    %902 = vmatprep.subr.mxu0 0.0
    %903 = vmatpush1.msra.mxu0 %v777
    %904 = vmatprep.subr.mxu0 0.0
    %905 = vmatpush1.msra.mxu0 %v778
    %906 = vmatprep.subr.mxu0 0.0
    %907 = vmatpush1.msra.mxu0 %v779
    %908 = vmatprep.subr.mxu0 0.0
    %909 = vmatpush1.msra.mxu0 %v780
    %910 = vmatprep.subr.mxu0 0.0
    %911 = vmatpush1.msra.mxu0 %v781
    %912 = vmatprep.subr.mxu0 0.0
    %913 = vmatpush1.msra.mxu0 %v782
    %914 = vmatprep.subr.mxu0 0.0
    %915 = vmatpush1.msra.mxu0 %v783
    %916 = vmatprep.subr.mxu0 0.0
    %917 = vmatpush1.msra.mxu0 %v784
    %918 = vmatprep.subr.mxu0 0.0
    %919 = vmatpush1.msra.mxu0 %v785
    %920 = vmatprep.subr.mxu0 0.0
    %921 = vmatpush1.msra.mxu0 %v786
    %922 = vmatprep.subr.mxu0 0.0
    %923 = vmatpush1.msra.mxu0 %v787
    %924 = vmatprep.subr.mxu0 0.0
    %925 = vmatpush1.msra.mxu0 %v788
    %926 = vmatprep.subr.mxu0 0.0
    %927 = vmatpush1.msra.mxu0 %v789
    %928 = vmatprep.subr.mxu0 0.0
    %929 = vmatpush1.msra.mxu0 %v790
    %930 = vmatprep.subr.mxu0 0.0
    %931 = vmatpush1.msra.mxu0 %v791
    %932 = vmatprep.subr.mxu0 0.0
    %933 = vmatpush1.msra.mxu0 %v792
    %934 = vmatprep.subr.mxu0 0.0
    %935 = vmatpush1.msra.mxu0 %v793
    %936 = vmatprep.subr.mxu0 0.0
    %937 = vmatpush1.msra.mxu0 %v794
    %938 = vmatprep.mubr.f32.mxu0 %v871
    %939 = vmatmul.mubr.f32.gmra.mrb[0].mxu0 %v870
    %v940 = vpop.f32.mrb[0].mxu0
    %v941 = vadd.f32 0.0, %v940
    %v942 = vpop.f32.mrb[0].mxu0
    %943 = vdwg.mxu0
    %v944 = vadd.f32 %v761, %v941
    %s945 = scalar_lea.vmem %s3, 1024
    %v946 = vld [vmem:[%s945] sm:$0xff]
    %v947 = vld [vmem:[%s945 + $0x8] sm:$0xff]
    %v948 = vld [vmem:[%s945 + $0x10] sm:$0xff]
    %v949 = vld [vmem:[%s945 + $0x18] sm:$0xff]
    %v950 = vld [vmem:[%s945 + $0x20] sm:$0xff]
    %v951 = vld [vmem:[%s945 + $0x28] sm:$0xff]
    %v952 = vld [vmem:[%s945 + $0x30] sm:$0xff]
    %v953 = vld [vmem:[%s945 + $0x38] sm:$0xff]
    %v954 = vld [vmem:[%s945 + $0x40] sm:$0xff]
    %v955 = vld [vmem:[%s945 + $0x48] sm:$0xff]
    %v956 = vld [vmem:[%s945 + $0x50] sm:$0xff]
    %v957 = vld [vmem:[%s945 + $0x58] sm:$0xff]
    %v958 = vld [vmem:[%s945 + $0x60] sm:$0xff]
    %v959 = vld [vmem:[%s945 + $0x68] sm:$0xff]
    %v960 = vld [vmem:[%s945 + $0x70] sm:$0xff]
    %v961 = vld [vmem:[%s945 + $0x78] sm:$0xff]
    %v962 = vld [vmem:[%s945 + $0x80] sm:$0xff]
    %v963 = vld [vmem:[%s945 + $0x88] sm:$0xff]
    %v964 = vld [vmem:[%s945 + $0x90] sm:$0xff]
    %v965 = vld [vmem:[%s945 + $0x98] sm:$0xff]
    %v966 = vld [vmem:[%s945 + $0xa0] sm:$0xff]
    %v967 = vld [vmem:[%s945 + $0xa8] sm:$0xff]
    %v968 = vld [vmem:[%s945 + $0xb0] sm:$0xff]
    %v969 = vld [vmem:[%s945 + $0xb8] sm:$0xff]
    %v970 = vld [vmem:[%s945 + $0xc0] sm:$0xff]
    %v971 = vld [vmem:[%s945 + $0xc8] sm:$0xff]
    %v972 = vld [vmem:[%s945 + $0xd0] sm:$0xff]
    %v973 = vld [vmem:[%s945 + $0xd8] sm:$0xff]
    %v974 = vld [vmem:[%s945 + $0xe0] sm:$0xff]
    %v975 = vld [vmem:[%s945 + $0xe8] sm:$0xff]
    %v976 = vld [vmem:[%s945 + $0xf0] sm:$0xff]
    %v977 = vld [vmem:[%s945 + $0xf8] sm:$0xff]
    %v978 = vrot.slane %v213, 4
    %v979 = vrot.slane %v214, 4
    %982 = vmatprep.subr.mxu0 0.0
    %983 = vmatpush1.msra.mxu0 %v946
    %984 = vmatprep.subr.mxu0 0.0
    %985 = vmatpush1.msra.mxu0 %v947
    %986 = vmatprep.subr.mxu0 0.0
    %987 = vmatpush1.msra.mxu0 %v948
    %988 = vmatprep.subr.mxu0 0.0
    %989 = vmatpush1.msra.mxu0 %v949
    %990 = vmatprep.subr.mxu0 0.0
    %991 = vmatpush1.msra.mxu0 %v950
    %992 = vmatprep.subr.mxu0 0.0
    %993 = vmatpush1.msra.mxu0 %v951
    %994 = vmatprep.subr.mxu0 0.0
    %995 = vmatpush1.msra.mxu0 %v952
    %996 = vmatprep.subr.mxu0 0.0
    %997 = vmatpush1.msra.mxu0 %v953
    %998 = vmatprep.subr.mxu0 0.0
    %999 = vmatpush1.msra.mxu0 %v954
    %1000 = vmatprep.subr.mxu0 0.0
    %1001 = vmatpush1.msra.mxu0 %v955
    %1002 = vmatprep.subr.mxu0 0.0
    %1003 = vmatpush1.msra.mxu0 %v956
    %1004 = vmatprep.subr.mxu0 0.0
    %1005 = vmatpush1.msra.mxu0 %v957
    %1006 = vmatprep.subr.mxu0 0.0
    %1007 = vmatpush1.msra.mxu0 %v958
    %1008 = vmatprep.subr.mxu0 0.0
    %1009 = vmatpush1.msra.mxu0 %v959
    %1010 = vmatprep.subr.mxu0 0.0
    %1011 = vmatpush1.msra.mxu0 %v960
    %1012 = vmatprep.subr.mxu0 0.0
    %1013 = vmatpush1.msra.mxu0 %v961
    %1014 = vmatprep.subr.mxu0 0.0
    %1015 = vmatpush1.msra.mxu0 %v962
    %1016 = vmatprep.subr.mxu0 0.0
    %1017 = vmatpush1.msra.mxu0 %v963
    %1018 = vmatprep.subr.mxu0 0.0
    %1019 = vmatpush1.msra.mxu0 %v964
    %1020 = vmatprep.subr.mxu0 0.0
    %1021 = vmatpush1.msra.mxu0 %v965
    %1022 = vmatprep.subr.mxu0 0.0
    %1023 = vmatpush1.msra.mxu0 %v966
    %1024 = vmatprep.subr.mxu0 0.0
    %1025 = vmatpush1.msra.mxu0 %v967
    %1026 = vmatprep.subr.mxu0 0.0
    %1027 = vmatpush1.msra.mxu0 %v968
    %1028 = vmatprep.subr.mxu0 0.0
    %1029 = vmatpush1.msra.mxu0 %v969
    %1030 = vmatprep.subr.mxu0 0.0
    %1031 = vmatpush1.msra.mxu0 %v970
    %1032 = vmatprep.subr.mxu0 0.0
    %1033 = vmatpush1.msra.mxu0 %v971
    %1034 = vmatprep.subr.mxu0 0.0
    %1035 = vmatpush1.msra.mxu0 %v972
    %1036 = vmatprep.subr.mxu0 0.0
    %1037 = vmatpush1.msra.mxu0 %v973
    %1038 = vmatprep.subr.mxu0 0.0
    %1039 = vmatpush1.msra.mxu0 %v974
    %1040 = vmatprep.subr.mxu0 0.0
    %1041 = vmatpush1.msra.mxu0 %v975
    %1042 = vmatprep.subr.mxu0 0.0
    %1043 = vmatpush1.msra.mxu0 %v976
    %1044 = vmatprep.subr.mxu0 0.0
    %1045 = vmatpush1.msra.mxu0 %v977
    %1046 = vmatprep.mubr.f32.mxu0 %v979
    %1047 = vmatmul.mubr.f32.gmra.mrb[0].mxu0 %v978
    %v1048 = vpop.f32.mrb[0].mxu0
    %v1049 = vadd.f32 0.0, %v1048
    %v1050 = vpop.f32.mrb[0].mxu0
    %1051 = vdwg.mxu0
    %v1052 = vadd.f32 %v869, %v1049
    %v1053 = vrot.slane %v215, 4
    %v1054 = vrot.slane %v216, 4
    %1057 = vmatprep.subr.mxu0 0.0
    %1058 = vmatpush1.msra.mxu0 %v946
    %1059 = vmatprep.subr.mxu0 0.0
    %1060 = vmatpush1.msra.mxu0 %v947
    %1061 = vmatprep.subr.mxu0 0.0
    %1062 = vmatpush1.msra.mxu0 %v948
    %1063 = vmatprep.subr.mxu0 0.0
    %1064 = vmatpush1.msra.mxu0 %v949
    %1065 = vmatprep.subr.mxu0 0.0
    %1066 = vmatpush1.msra.mxu0 %v950
    %1067 = vmatprep.subr.mxu0 0.0
    %1068 = vmatpush1.msra.mxu0 %v951
    %1069 = vmatprep.subr.mxu0 0.0
    %1070 = vmatpush1.msra.mxu0 %v952
    %1071 = vmatprep.subr.mxu0 0.0
    %1072 = vmatpush1.msra.mxu0 %v953
    %1073 = vmatprep.subr.mxu0 0.0
    %1074 = vmatpush1.msra.mxu0 %v954
    %1075 = vmatprep.subr.mxu0 0.0
    %1076 = vmatpush1.msra.mxu0 %v955
    %1077 = vmatprep.subr.mxu0 0.0
    %1078 = vmatpush1.msra.mxu0 %v956
    %1079 = vmatprep.subr.mxu0 0.0
    %1080 = vmatpush1.msra.mxu0 %v957
    %1081 = vmatprep.subr.mxu0 0.0
    %1082 = vmatpush1.msra.mxu0 %v958
    %1083 = vmatprep.subr.mxu0 0.0
    %1084 = vmatpush1.msra.mxu0 %v959
    %1085 = vmatprep.subr.mxu0 0.0
    %1086 = vmatpush1.msra.mxu0 %v960
    %1087 = vmatprep.subr.mxu0 0.0
    %1088 = vmatpush1.msra.mxu0 %v961
    %1089 = vmatprep.subr.mxu0 0.0
    %1090 = vmatpush1.msra.mxu0 %v962
    %1091 = vmatprep.subr.mxu0 0.0
    %1092 = vmatpush1.msra.mxu0 %v963
    %1093 = vmatprep.subr.mxu0 0.0
    %1094 = vmatpush1.msra.mxu0 %v964
    %1095 = vmatprep.subr.mxu0 0.0
    %1096 = vmatpush1.msra.mxu0 %v965
    %1097 = vmatprep.subr.mxu0 0.0
    %1098 = vmatpush1.msra.mxu0 %v966
    %1099 = vmatprep.subr.mxu0 0.0
    %1100 = vmatpush1.msra.mxu0 %v967
    %1101 = vmatprep.subr.mxu0 0.0
    %1102 = vmatpush1.msra.mxu0 %v968
    %1103 = vmatprep.subr.mxu0 0.0
    %1104 = vmatpush1.msra.mxu0 %v969
    %1105 = vmatprep.subr.mxu0 0.0
    %1106 = vmatpush1.msra.mxu0 %v970
    %1107 = vmatprep.subr.mxu0 0.0
    %1108 = vmatpush1.msra.mxu0 %v971
    %1109 = vmatprep.subr.mxu0 0.0
    %1110 = vmatpush1.msra.mxu0 %v972
    %1111 = vmatprep.subr.mxu0 0.0
    %1112 = vmatpush1.msra.mxu0 %v973
    %1113 = vmatprep.subr.mxu0 0.0
    %1114 = vmatpush1.msra.mxu0 %v974
    %1115 = vmatprep.subr.mxu0 0.0
    %1116 = vmatpush1.msra.mxu0 %v975
    %1117 = vmatprep.subr.mxu0 0.0
    %1118 = vmatpush1.msra.mxu0 %v976
    %1119 = vmatprep.subr.mxu0 0.0
    %1120 = vmatpush1.msra.mxu0 %v977
    %1121 = vmatprep.mubr.f32.mxu0 %v1054
    %1122 = vmatmul.mubr.f32.gmra.mrb[0].mxu0 %v1053
    %v1123 = vpop.f32.mrb[0].mxu0
    %v1124 = vadd.f32 0.0, %v1123
    %v1125 = vpop.f32.mrb[0].mxu0
    %1126 = vdwg.mxu0
    %v1127 = vadd.f32 %v944, %v1124
    %s1128 = scalar_lea.vmem %s3, 1280
    %v1129 = vld [vmem:[%s1128] sm:$0xff]
    %v1130 = vld [vmem:[%s1128 + $0x8] sm:$0xff]
    %v1131 = vld [vmem:[%s1128 + $0x10] sm:$0xff]
    %v1132 = vld [vmem:[%s1128 + $0x18] sm:$0xff]
    %v1133 = vld [vmem:[%s1128 + $0x20] sm:$0xff]
    %v1134 = vld [vmem:[%s1128 + $0x28] sm:$0xff]
    %v1135 = vld [vmem:[%s1128 + $0x30] sm:$0xff]
    %v1136 = vld [vmem:[%s1128 + $0x38] sm:$0xff]
    %v1137 = vld [vmem:[%s1128 + $0x40] sm:$0xff]
    %v1138 = vld [vmem:[%s1128 + $0x48] sm:$0xff]
    %v1139 = vld [vmem:[%s1128 + $0x50] sm:$0xff]
    %v1140 = vld [vmem:[%s1128 + $0x58] sm:$0xff]
    %v1141 = vld [vmem:[%s1128 + $0x60] sm:$0xff]
    %v1142 = vld [vmem:[%s1128 + $0x68] sm:$0xff]
    %v1143 = vld [vmem:[%s1128 + $0x70] sm:$0xff]
    %v1144 = vld [vmem:[%s1128 + $0x78] sm:$0xff]
    %v1145 = vld [vmem:[%s1128 + $0x80] sm:$0xff]
    %v1146 = vld [vmem:[%s1128 + $0x88] sm:$0xff]
    %v1147 = vld [vmem:[%s1128 + $0x90] sm:$0xff]
    %v1148 = vld [vmem:[%s1128 + $0x98] sm:$0xff]
    %v1149 = vld [vmem:[%s1128 + $0xa0] sm:$0xff]
    %v1150 = vld [vmem:[%s1128 + $0xa8] sm:$0xff]
    %v1151 = vld [vmem:[%s1128 + $0xb0] sm:$0xff]
    %v1152 = vld [vmem:[%s1128 + $0xb8] sm:$0xff]
    %v1153 = vld [vmem:[%s1128 + $0xc0] sm:$0xff]
    %v1154 = vld [vmem:[%s1128 + $0xc8] sm:$0xff]
    %v1155 = vld [vmem:[%s1128 + $0xd0] sm:$0xff]
    %v1156 = vld [vmem:[%s1128 + $0xd8] sm:$0xff]
    %v1157 = vld [vmem:[%s1128 + $0xe0] sm:$0xff]
    %v1158 = vld [vmem:[%s1128 + $0xe8] sm:$0xff]
    %v1159 = vld [vmem:[%s1128 + $0xf0] sm:$0xff]
    %v1160 = vld [vmem:[%s1128 + $0xf8] sm:$0xff]
    %v1161 = vrot.slane %v213, 5
    %v1162 = vrot.slane %v214, 5
    %1165 = vmatprep.subr.mxu0 0.0
    %1166 = vmatpush1.msra.mxu0 %v1129
    %1167 = vmatprep.subr.mxu0 0.0
    %1168 = vmatpush1.msra.mxu0 %v1130
    %1169 = vmatprep.subr.mxu0 0.0
    %1170 = vmatpush1.msra.mxu0 %v1131
    %1171 = vmatprep.subr.mxu0 0.0
    %1172 = vmatpush1.msra.mxu0 %v1132
    %1173 = vmatprep.subr.mxu0 0.0
    %1174 = vmatpush1.msra.mxu0 %v1133
    %1175 = vmatprep.subr.mxu0 0.0
    %1176 = vmatpush1.msra.mxu0 %v1134
    %1177 = vmatprep.subr.mxu0 0.0
    %1178 = vmatpush1.msra.mxu0 %v1135
    %1179 = vmatprep.subr.mxu0 0.0
    %1180 = vmatpush1.msra.mxu0 %v1136
    %1181 = vmatprep.subr.mxu0 0.0
    %1182 = vmatpush1.msra.mxu0 %v1137
    %1183 = vmatprep.subr.mxu0 0.0
    %1184 = vmatpush1.msra.mxu0 %v1138
    %1185 = vmatprep.subr.mxu0 0.0
    %1186 = vmatpush1.msra.mxu0 %v1139
    %1187 = vmatprep.subr.mxu0 0.0
    %1188 = vmatpush1.msra.mxu0 %v1140
    %1189 = vmatprep.subr.mxu0 0.0
    %1190 = vmatpush1.msra.mxu0 %v1141
    %1191 = vmatprep.subr.mxu0 0.0
    %1192 = vmatpush1.msra.mxu0 %v1142
    %1193 = vmatprep.subr.mxu0 0.0
    %1194 = vmatpush1.msra.mxu0 %v1143
    %1195 = vmatprep.subr.mxu0 0.0
    %1196 = vmatpush1.msra.mxu0 %v1144
    %1197 = vmatprep.subr.mxu0 0.0
    %1198 = vmatpush1.msra.mxu0 %v1145
    %1199 = vmatprep.subr.mxu0 0.0
    %1200 = vmatpush1.msra.mxu0 %v1146
    %1201 = vmatprep.subr.mxu0 0.0
    %1202 = vmatpush1.msra.mxu0 %v1147
    %1203 = vmatprep.subr.mxu0 0.0
    %1204 = vmatpush1.msra.mxu0 %v1148
    %1205 = vmatprep.subr.mxu0 0.0
    %1206 = vmatpush1.msra.mxu0 %v1149
    %1207 = vmatprep.subr.mxu0 0.0
    %1208 = vmatpush1.msra.mxu0 %v1150
    %1209 = vmatprep.subr.mxu0 0.0
    %1210 = vmatpush1.msra.mxu0 %v1151
    %1211 = vmatprep.subr.mxu0 0.0
    %1212 = vmatpush1.msra.mxu0 %v1152
    %1213 = vmatprep.subr.mxu0 0.0
    %1214 = vmatpush1.msra.mxu0 %v1153
    %1215 = vmatprep.subr.mxu0 0.0
    %1216 = vmatpush1.msra.mxu0 %v1154
    %1217 = vmatprep.subr.mxu0 0.0
    %1218 = vmatpush1.msra.mxu0 %v1155
    %1219 = vmatprep.subr.mxu0 0.0
    %1220 = vmatpush1.msra.mxu0 %v1156
    %1221 = vmatprep.subr.mxu0 0.0
    %1222 = vmatpush1.msra.mxu0 %v1157
    %1223 = vmatprep.subr.mxu0 0.0
    %1224 = vmatpush1.msra.mxu0 %v1158
    %1225 = vmatprep.subr.mxu0 0.0
    %1226 = vmatpush1.msra.mxu0 %v1159
    %1227 = vmatprep.subr.mxu0 0.0
    %1228 = vmatpush1.msra.mxu0 %v1160
    %1229 = vmatprep.mubr.f32.mxu0 %v1162
    %1230 = vmatmul.mubr.f32.gmra.mrb[0].mxu0 %v1161
    %v1231 = vpop.f32.mrb[0].mxu0
    %v1232 = vadd.f32 0.0, %v1231
    %v1233 = vpop.f32.mrb[0].mxu0
    %1234 = vdwg.mxu0
    %v1235 = vadd.f32 %v1052, %v1232
    %v1236 = vrot.slane %v215, 5
    %v1237 = vrot.slane %v216, 5
    %1240 = vmatprep.subr.mxu0 0.0
    %1241 = vmatpush1.msra.mxu0 %v1129
    %1242 = vmatprep.subr.mxu0 0.0
    %1243 = vmatpush1.msra.mxu0 %v1130
    %1244 = vmatprep.subr.mxu0 0.0
    %1245 = vmatpush1.msra.mxu0 %v1131
    %1246 = vmatprep.subr.mxu0 0.0
    %1247 = vmatpush1.msra.mxu0 %v1132
    %1248 = vmatprep.subr.mxu0 0.0
    %1249 = vmatpush1.msra.mxu0 %v1133
    %1250 = vmatprep.subr.mxu0 0.0
    %1251 = vmatpush1.msra.mxu0 %v1134
    %1252 = vmatprep.subr.mxu0 0.0
    %1253 = vmatpush1.msra.mxu0 %v1135
    %1254 = vmatprep.subr.mxu0 0.0
    %1255 = vmatpush1.msra.mxu0 %v1136
    %1256 = vmatprep.subr.mxu0 0.0
    %1257 = vmatpush1.msra.mxu0 %v1137
    %1258 = vmatprep.subr.mxu0 0.0
    %1259 = vmatpush1.msra.mxu0 %v1138
    %1260 = vmatprep.subr.mxu0 0.0
    %1261 = vmatpush1.msra.mxu0 %v1139
    %1262 = vmatprep.subr.mxu0 0.0
    %1263 = vmatpush1.msra.mxu0 %v1140
    %1264 = vmatprep.subr.mxu0 0.0
    %1265 = vmatpush1.msra.mxu0 %v1141
    %1266 = vmatprep.subr.mxu0 0.0
    %1267 = vmatpush1.msra.mxu0 %v1142
    %1268 = vmatprep.subr.mxu0 0.0
    %1269 = vmatpush1.msra.mxu0 %v1143
    %1270 = vmatprep.subr.mxu0 0.0
    %1271 = vmatpush1.msra.mxu0 %v1144
    %1272 = vmatprep.subr.mxu0 0.0
    %1273 = vmatpush1.msra.mxu0 %v1145
    %1274 = vmatprep.subr.mxu0 0.0
    %1275 = vmatpush1.msra.mxu0 %v1146
    %1276 = vmatprep.subr.mxu0 0.0
    %1277 = vmatpush1.msra.mxu0 %v1147
    %1278 = vmatprep.subr.mxu0 0.0
    %1279 = vmatpush1.msra.mxu0 %v1148
    %1280 = vmatprep.subr.mxu0 0.0
    %1281 = vmatpush1.msra.mxu0 %v1149
    %1282 = vmatprep.subr.mxu0 0.0
    %1283 = vmatpush1.msra.mxu0 %v1150
    %1284 = vmatprep.subr.mxu0 0.0
    %1285 = vmatpush1.msra.mxu0 %v1151
    %1286 = vmatprep.subr.mxu0 0.0
    %1287 = vmatpush1.msra.mxu0 %v1152
    %1288 = vmatprep.subr.mxu0 0.0
    %1289 = vmatpush1.msra.mxu0 %v1153
    %1290 = vmatprep.subr.mxu0 0.0
    %1291 = vmatpush1.msra.mxu0 %v1154
    %1292 = vmatprep.subr.mxu0 0.0
    %1293 = vmatpush1.msra.mxu0 %v1155
    %1294 = vmatprep.subr.mxu0 0.0
    %1295 = vmatpush1.msra.mxu0 %v1156
    %1296 = vmatprep.subr.mxu0 0.0
    %1297 = vmatpush1.msra.mxu0 %v1157
    %1298 = vmatprep.subr.mxu0 0.0
    %1299 = vmatpush1.msra.mxu0 %v1158
    %1300 = vmatprep.subr.mxu0 0.0
    %1301 = vmatpush1.msra.mxu0 %v1159
    %1302 = vmatprep.subr.mxu0 0.0
    %1303 = vmatpush1.msra.mxu0 %v1160
    %1304 = vmatprep.mubr.f32.mxu0 %v1237
    %1305 = vmatmul.mubr.f32.gmra.mrb[0].mxu0 %v1236
    %v1306 = vpop.f32.mrb[0].mxu0
    %v1307 = vadd.f32 0.0, %v1306
    %v1308 = vpop.f32.mrb[0].mxu0
    %1309 = vdwg.mxu0
    %v1310 = vadd.f32 %v1127, %v1307
    %s1311 = scalar_lea.vmem %s3, 1536
    %v1312 = vld [vmem:[%s1311] sm:$0xff]
    %v1313 = vld [vmem:[%s1311 + $0x8] sm:$0xff]
    %v1314 = vld [vmem:[%s1311 + $0x10] sm:$0xff]
    %v1315 = vld [vmem:[%s1311 + $0x18] sm:$0xff]
    %v1316 = vld [vmem:[%s1311 + $0x20] sm:$0xff]
    %v1317 = vld [vmem:[%s1311 + $0x28] sm:$0xff]
    %v1318 = vld [vmem:[%s1311 + $0x30] sm:$0xff]
    %v1319 = vld [vmem:[%s1311 + $0x38] sm:$0xff]
    %v1320 = vld [vmem:[%s1311 + $0x40] sm:$0xff]
    %v1321 = vld [vmem:[%s1311 + $0x48] sm:$0xff]
    %v1322 = vld [vmem:[%s1311 + $0x50] sm:$0xff]
    %v1323 = vld [vmem:[%s1311 + $0x58] sm:$0xff]
    %v1324 = vld [vmem:[%s1311 + $0x60] sm:$0xff]
    %v1325 = vld [vmem:[%s1311 + $0x68] sm:$0xff]
    %v1326 = vld [vmem:[%s1311 + $0x70] sm:$0xff]
    %v1327 = vld [vmem:[%s1311 + $0x78] sm:$0xff]
    %v1328 = vld [vmem:[%s1311 + $0x80] sm:$0xff]
    %v1329 = vld [vmem:[%s1311 + $0x88] sm:$0xff]
    %v1330 = vld [vmem:[%s1311 + $0x90] sm:$0xff]
    %v1331 = vld [vmem:[%s1311 + $0x98] sm:$0xff]
    %v1332 = vld [vmem:[%s1311 + $0xa0] sm:$0xff]
    %v1333 = vld [vmem:[%s1311 + $0xa8] sm:$0xff]
    %v1334 = vld [vmem:[%s1311 + $0xb0] sm:$0xff]
    %v1335 = vld [vmem:[%s1311 + $0xb8] sm:$0xff]
    %v1336 = vld [vmem:[%s1311 + $0xc0] sm:$0xff]
    %v1337 = vld [vmem:[%s1311 + $0xc8] sm:$0xff]
    %v1338 = vld [vmem:[%s1311 + $0xd0] sm:$0xff]
    %v1339 = vld [vmem:[%s1311 + $0xd8] sm:$0xff]
    %v1340 = vld [vmem:[%s1311 + $0xe0] sm:$0xff]
    %v1341 = vld [vmem:[%s1311 + $0xe8] sm:$0xff]
    %v1342 = vld [vmem:[%s1311 + $0xf0] sm:$0xff]
    %v1343 = vld [vmem:[%s1311 + $0xf8] sm:$0xff]
    %v1344 = vrot.slane %v213, 6
    %v1345 = vrot.slane %v214, 6
    %1348 = vmatprep.subr.mxu0 0.0
    %1349 = vmatpush1.msra.mxu0 %v1312
    %1350 = vmatprep.subr.mxu0 0.0
    %1351 = vmatpush1.msra.mxu0 %v1313
    %1352 = vmatprep.subr.mxu0 0.0
    %1353 = vmatpush1.msra.mxu0 %v1314
    %1354 = vmatprep.subr.mxu0 0.0
    %1355 = vmatpush1.msra.mxu0 %v1315
    %1356 = vmatprep.subr.mxu0 0.0
    %1357 = vmatpush1.msra.mxu0 %v1316
    %1358 = vmatprep.subr.mxu0 0.0
    %1359 = vmatpush1.msra.mxu0 %v1317
    %1360 = vmatprep.subr.mxu0 0.0
    %1361 = vmatpush1.msra.mxu0 %v1318
    %1362 = vmatprep.subr.mxu0 0.0
    %1363 = vmatpush1.msra.mxu0 %v1319
    %1364 = vmatprep.subr.mxu0 0.0
    %1365 = vmatpush1.msra.mxu0 %v1320
    %1366 = vmatprep.subr.mxu0 0.0
    %1367 = vmatpush1.msra.mxu0 %v1321
    %1368 = vmatprep.subr.mxu0 0.0
    %1369 = vmatpush1.msra.mxu0 %v1322
    %1370 = vmatprep.subr.mxu0 0.0
    %1371 = vmatpush1.msra.mxu0 %v1323
    %1372 = vmatprep.subr.mxu0 0.0
    %1373 = vmatpush1.msra.mxu0 %v1324
    %1374 = vmatprep.subr.mxu0 0.0
    %1375 = vmatpush1.msra.mxu0 %v1325
    %1376 = vmatprep.subr.mxu0 0.0
    %1377 = vmatpush1.msra.mxu0 %v1326
    %1378 = vmatprep.subr.mxu0 0.0
    %1379 = vmatpush1.msra.mxu0 %v1327
    %1380 = vmatprep.subr.mxu0 0.0
    %1381 = vmatpush1.msra.mxu0 %v1328
    %1382 = vmatprep.subr.mxu0 0.0
    %1383 = vmatpush1.msra.mxu0 %v1329
    %1384 = vmatprep.subr.mxu0 0.0
    %1385 = vmatpush1.msra.mxu0 %v1330
    %1386 = vmatprep.subr.mxu0 0.0
    %1387 = vmatpush1.msra.mxu0 %v1331
    %1388 = vmatprep.subr.mxu0 0.0
    %1389 = vmatpush1.msra.mxu0 %v1332
    %1390 = vmatprep.subr.mxu0 0.0
    %1391 = vmatpush1.msra.mxu0 %v1333
    %1392 = vmatprep.subr.mxu0 0.0
    %1393 = vmatpush1.msra.mxu0 %v1334
    %1394 = vmatprep.subr.mxu0 0.0
    %1395 = vmatpush1.msra.mxu0 %v1335
    %1396 = vmatprep.subr.mxu0 0.0
    %1397 = vmatpush1.msra.mxu0 %v1336
    %1398 = vmatprep.subr.mxu0 0.0
    %1399 = vmatpush1.msra.mxu0 %v1337
    %1400 = vmatprep.subr.mxu0 0.0
    %1401 = vmatpush1.msra.mxu0 %v1338
    %1402 = vmatprep.subr.mxu0 0.0
    %1403 = vmatpush1.msra.mxu0 %v1339
    %1404 = vmatprep.subr.mxu0 0.0
    %1405 = vmatpush1.msra.mxu0 %v1340
    %1406 = vmatprep.subr.mxu0 0.0
    %1407 = vmatpush1.msra.mxu0 %v1341
    %1408 = vmatprep.subr.mxu0 0.0
    %1409 = vmatpush1.msra.mxu0 %v1342
    %1410 = vmatprep.subr.mxu0 0.0
    %1411 = vmatpush1.msra.mxu0 %v1343
    %1412 = vmatprep.mubr.f32.mxu0 %v1345
    %1413 = vmatmul.mubr.f32.gmra.mrb[0].mxu0 %v1344
    %v1414 = vpop.f32.mrb[0].mxu0
    %v1415 = vadd.f32 0.0, %v1414
    %v1416 = vpop.f32.mrb[0].mxu0
    %1417 = vdwg.mxu0
    %v1418 = vadd.f32 %v1235, %v1415
    %v1419 = vrot.slane %v215, 6
    %v1420 = vrot.slane %v216, 6
    %1423 = vmatprep.subr.mxu0 0.0
    %1424 = vmatpush1.msra.mxu0 %v1312
    %1425 = vmatprep.subr.mxu0 0.0
    %1426 = vmatpush1.msra.mxu0 %v1313
    %1427 = vmatprep.subr.mxu0 0.0
    %1428 = vmatpush1.msra.mxu0 %v1314
    %1429 = vmatprep.subr.mxu0 0.0
    %1430 = vmatpush1.msra.mxu0 %v1315
    %1431 = vmatprep.subr.mxu0 0.0
    %1432 = vmatpush1.msra.mxu0 %v1316
    %1433 = vmatprep.subr.mxu0 0.0
    %1434 = vmatpush1.msra.mxu0 %v1317
    %1435 = vmatprep.subr.mxu0 0.0
    %1436 = vmatpush1.msra.mxu0 %v1318
    %1437 = vmatprep.subr.mxu0 0.0
    %1438 = vmatpush1.msra.mxu0 %v1319
    %1439 = vmatprep.subr.mxu0 0.0
    %1440 = vmatpush1.msra.mxu0 %v1320
    %1441 = vmatprep.subr.mxu0 0.0
    %1442 = vmatpush1.msra.mxu0 %v1321
    %1443 = vmatprep.subr.mxu0 0.0
    %1444 = vmatpush1.msra.mxu0 %v1322
    %1445 = vmatprep.subr.mxu0 0.0
    %1446 = vmatpush1.msra.mxu0 %v1323
    %1447 = vmatprep.subr.mxu0 0.0
    %1448 = vmatpush1.msra.mxu0 %v1324
    %1449 = vmatprep.subr.mxu0 0.0
    %1450 = vmatpush1.msra.mxu0 %v1325
    %1451 = vmatprep.subr.mxu0 0.0
    %1452 = vmatpush1.msra.mxu0 %v1326
    %1453 = vmatprep.subr.mxu0 0.0
    %1454 = vmatpush1.msra.mxu0 %v1327
    %1455 = vmatprep.subr.mxu0 0.0
    %1456 = vmatpush1.msra.mxu0 %v1328
    %1457 = vmatprep.subr.mxu0 0.0
    %1458 = vmatpush1.msra.mxu0 %v1329
    %1459 = vmatprep.subr.mxu0 0.0
    %1460 = vmatpush1.msra.mxu0 %v1330
    %1461 = vmatprep.subr.mxu0 0.0
    %1462 = vmatpush1.msra.mxu0 %v1331
    %1463 = vmatprep.subr.mxu0 0.0
    %1464 = vmatpush1.msra.mxu0 %v1332
    %1465 = vmatprep.subr.mxu0 0.0
    %1466 = vmatpush1.msra.mxu0 %v1333
    %1467 = vmatprep.subr.mxu0 0.0
    %1468 = vmatpush1.msra.mxu0 %v1334
    %1469 = vmatprep.subr.mxu0 0.0
    %1470 = vmatpush1.msra.mxu0 %v1335
    %1471 = vmatprep.subr.mxu0 0.0
    %1472 = vmatpush1.msra.mxu0 %v1336
    %1473 = vmatprep.subr.mxu0 0.0
    %1474 = vmatpush1.msra.mxu0 %v1337
    %1475 = vmatprep.subr.mxu0 0.0
    %1476 = vmatpush1.msra.mxu0 %v1338
    %1477 = vmatprep.subr.mxu0 0.0
    %1478 = vmatpush1.msra.mxu0 %v1339
    %1479 = vmatprep.subr.mxu0 0.0
    %1480 = vmatpush1.msra.mxu0 %v1340
    %1481 = vmatprep.subr.mxu0 0.0
    %1482 = vmatpush1.msra.mxu0 %v1341
    %1483 = vmatprep.subr.mxu0 0.0
    %1484 = vmatpush1.msra.mxu0 %v1342
    %1485 = vmatprep.subr.mxu0 0.0
    %1486 = vmatpush1.msra.mxu0 %v1343
    %1487 = vmatprep.mubr.f32.mxu0 %v1420
    %1488 = vmatmul.mubr.f32.gmra.mrb[0].mxu0 %v1419
    %v1489 = vpop.f32.mrb[0].mxu0
    %v1490 = vadd.f32 0.0, %v1489
    %v1491 = vpop.f32.mrb[0].mxu0
    %1492 = vdwg.mxu0
    %v1493 = vadd.f32 %v1310, %v1490
    %s1494 = scalar_lea.vmem %s3, 1792
    %v1495 = vld [vmem:[%s1494] sm:$0xff]
    %v1496 = vld [vmem:[%s1494 + $0x8] sm:$0xff]
    %v1497 = vld [vmem:[%s1494 + $0x10] sm:$0xff]
    %v1498 = vld [vmem:[%s1494 + $0x18] sm:$0xff]
    %v1499 = vld [vmem:[%s1494 + $0x20] sm:$0xff]
    %v1500 = vld [vmem:[%s1494 + $0x28] sm:$0xff]
    %v1501 = vld [vmem:[%s1494 + $0x30] sm:$0xff]
    %v1502 = vld [vmem:[%s1494 + $0x38] sm:$0xff]
    %v1503 = vld [vmem:[%s1494 + $0x40] sm:$0xff]
    %v1504 = vld [vmem:[%s1494 + $0x48] sm:$0xff]
    %v1505 = vld [vmem:[%s1494 + $0x50] sm:$0xff]
    %v1506 = vld [vmem:[%s1494 + $0x58] sm:$0xff]
    %v1507 = vld [vmem:[%s1494 + $0x60] sm:$0xff]
    %v1508 = vld [vmem:[%s1494 + $0x68] sm:$0xff]
    %v1509 = vld [vmem:[%s1494 + $0x70] sm:$0xff]
    %v1510 = vld [vmem:[%s1494 + $0x78] sm:$0xff]
    %v1511 = vld [vmem:[%s1494 + $0x80] sm:$0xff]
    %v1512 = vld [vmem:[%s1494 + $0x88] sm:$0xff]
    %v1513 = vld [vmem:[%s1494 + $0x90] sm:$0xff]
    %v1514 = vld [vmem:[%s1494 + $0x98] sm:$0xff]
    %v1515 = vld [vmem:[%s1494 + $0xa0] sm:$0xff]
    %v1516 = vld [vmem:[%s1494 + $0xa8] sm:$0xff]
    %v1517 = vld [vmem:[%s1494 + $0xb0] sm:$0xff]
    %v1518 = vld [vmem:[%s1494 + $0xb8] sm:$0xff]
    %v1519 = vld [vmem:[%s1494 + $0xc0] sm:$0xff]
    %v1520 = vld [vmem:[%s1494 + $0xc8] sm:$0xff]
    %v1521 = vld [vmem:[%s1494 + $0xd0] sm:$0xff]
    %v1522 = vld [vmem:[%s1494 + $0xd8] sm:$0xff]
    %v1523 = vld [vmem:[%s1494 + $0xe0] sm:$0xff]
    %v1524 = vld [vmem:[%s1494 + $0xe8] sm:$0xff]
    %v1525 = vld [vmem:[%s1494 + $0xf0] sm:$0xff]
    %v1526 = vld [vmem:[%s1494 + $0xf8] sm:$0xff]
    %v1527 = vrot.slane %v213, 7
    %v1528 = vrot.slane %v214, 7
    %1531 = vmatprep.subr.mxu0 0.0
    %1532 = vmatpush1.msra.mxu0 %v1495
    %1533 = vmatprep.subr.mxu0 0.0
    %1534 = vmatpush1.msra.mxu0 %v1496
    %1535 = vmatprep.subr.mxu0 0.0
    %1536 = vmatpush1.msra.mxu0 %v1497
    %1537 = vmatprep.subr.mxu0 0.0
    %1538 = vmatpush1.msra.mxu0 %v1498
    %1539 = vmatprep.subr.mxu0 0.0
    %1540 = vmatpush1.msra.mxu0 %v1499
    %1541 = vmatprep.subr.mxu0 0.0
    %1542 = vmatpush1.msra.mxu0 %v1500
    %1543 = vmatprep.subr.mxu0 0.0
    %1544 = vmatpush1.msra.mxu0 %v1501
    %1545 = vmatprep.subr.mxu0 0.0
    %1546 = vmatpush1.msra.mxu0 %v1502
    %1547 = vmatprep.subr.mxu0 0.0
    %1548 = vmatpush1.msra.mxu0 %v1503
    %1549 = vmatprep.subr.mxu0 0.0
    %1550 = vmatpush1.msra.mxu0 %v1504
    %1551 = vmatprep.subr.mxu0 0.0
    %1552 = vmatpush1.msra.mxu0 %v1505
    %1553 = vmatprep.subr.mxu0 0.0
    %1554 = vmatpush1.msra.mxu0 %v1506
    %1555 = vmatprep.subr.mxu0 0.0
    %1556 = vmatpush1.msra.mxu0 %v1507
    %1557 = vmatprep.subr.mxu0 0.0
    %1558 = vmatpush1.msra.mxu0 %v1508
    %1559 = vmatprep.subr.mxu0 0.0
    %1560 = vmatpush1.msra.mxu0 %v1509
    %1561 = vmatprep.subr.mxu0 0.0
    %1562 = vmatpush1.msra.mxu0 %v1510
    %1563 = vmatprep.subr.mxu0 0.0
    %1564 = vmatpush1.msra.mxu0 %v1511
    %1565 = vmatprep.subr.mxu0 0.0
    %1566 = vmatpush1.msra.mxu0 %v1512
    %1567 = vmatprep.subr.mxu0 0.0
    %1568 = vmatpush1.msra.mxu0 %v1513
    %1569 = vmatprep.subr.mxu0 0.0
    %1570 = vmatpush1.msra.mxu0 %v1514
    %1571 = vmatprep.subr.mxu0 0.0
    %1572 = vmatpush1.msra.mxu0 %v1515
    %1573 = vmatprep.subr.mxu0 0.0
    %1574 = vmatpush1.msra.mxu0 %v1516
    %1575 = vmatprep.subr.mxu0 0.0
    %1576 = vmatpush1.msra.mxu0 %v1517
    %1577 = vmatprep.subr.mxu0 0.0
    %1578 = vmatpush1.msra.mxu0 %v1518
    %1579 = vmatprep.subr.mxu0 0.0
    %1580 = vmatpush1.msra.mxu0 %v1519
    %1581 = vmatprep.subr.mxu0 0.0
    %1582 = vmatpush1.msra.mxu0 %v1520
    %1583 = vmatprep.subr.mxu0 0.0
    %1584 = vmatpush1.msra.mxu0 %v1521
    %1585 = vmatprep.subr.mxu0 0.0
    %1586 = vmatpush1.msra.mxu0 %v1522
    %1587 = vmatprep.subr.mxu0 0.0
    %1588 = vmatpush1.msra.mxu0 %v1523
    %1589 = vmatprep.subr.mxu0 0.0
    %1590 = vmatpush1.msra.mxu0 %v1524
    %1591 = vmatprep.subr.mxu0 0.0
    %1592 = vmatpush1.msra.mxu0 %v1525
    %1593 = vmatprep.subr.mxu0 0.0
    %1594 = vmatpush1.msra.mxu0 %v1526
    %1595 = vmatprep.mubr.f32.mxu0 %v1528
    %1596 = vmatmul.mubr.f32.gmra.mrb[0].mxu0 %v1527
    %v1597 = vpop.f32.mrb[0].mxu0
    %v1598 = vadd.f32 0.0, %v1597
    %v1599 = vpop.f32.mrb[0].mxu0
    %1600 = vdwg.mxu0
    %v1601 = vadd.f32 %v1418, %v1598
    %v1602 = vrot.slane %v215, 7
    %v1603 = vrot.slane %v216, 7
    %1606 = vmatprep.subr.mxu0 0.0
    %1607 = vmatpush1.msra.mxu0 %v1495
    %1608 = vmatprep.subr.mxu0 0.0
    %1609 = vmatpush1.msra.mxu0 %v1496
    %1610 = vmatprep.subr.mxu0 0.0
    %1611 = vmatpush1.msra.mxu0 %v1497
    %1612 = vmatprep.subr.mxu0 0.0
    %1613 = vmatpush1.msra.mxu0 %v1498
    %1614 = vmatprep.subr.mxu0 0.0
    %1615 = vmatpush1.msra.mxu0 %v1499
    %1616 = vmatprep.subr.mxu0 0.0
    %1617 = vmatpush1.msra.mxu0 %v1500
    %1618 = vmatprep.subr.mxu0 0.0
    %1619 = vmatpush1.msra.mxu0 %v1501
    %1620 = vmatprep.subr.mxu0 0.0
    %1621 = vmatpush1.msra.mxu0 %v1502
    %1622 = vmatprep.subr.mxu0 0.0
    %1623 = vmatpush1.msra.mxu0 %v1503
    %1624 = vmatprep.subr.mxu0 0.0
    %1625 = vmatpush1.msra.mxu0 %v1504
    %1626 = vmatprep.subr.mxu0 0.0
    %1627 = vmatpush1.msra.mxu0 %v1505
    %1628 = vmatprep.subr.mxu0 0.0
    %1629 = vmatpush1.msra.mxu0 %v1506
    %1630 = vmatprep.subr.mxu0 0.0
    %1631 = vmatpush1.msra.mxu0 %v1507
    %1632 = vmatprep.subr.mxu0 0.0
    %1633 = vmatpush1.msra.mxu0 %v1508
    %1634 = vmatprep.subr.mxu0 0.0
    %1635 = vmatpush1.msra.mxu0 %v1509
    %1636 = vmatprep.subr.mxu0 0.0
    %1637 = vmatpush1.msra.mxu0 %v1510
    %1638 = vmatprep.subr.mxu0 0.0
    %1639 = vmatpush1.msra.mxu0 %v1511
    %1640 = vmatprep.subr.mxu0 0.0
    %1641 = vmatpush1.msra.mxu0 %v1512
    %1642 = vmatprep.subr.mxu0 0.0
    %1643 = vmatpush1.msra.mxu0 %v1513
    %1644 = vmatprep.subr.mxu0 0.0
    %1645 = vmatpush1.msra.mxu0 %v1514
    %1646 = vmatprep.subr.mxu0 0.0
    %1647 = vmatpush1.msra.mxu0 %v1515
    %1648 = vmatprep.subr.mxu0 0.0
    %1649 = vmatpush1.msra.mxu0 %v1516
    %1650 = vmatprep.subr.mxu0 0.0
    %1651 = vmatpush1.msra.mxu0 %v1517
    %1652 = vmatprep.subr.mxu0 0.0
    %1653 = vmatpush1.msra.mxu0 %v1518
    %1654 = vmatprep.subr.mxu0 0.0
    %1655 = vmatpush1.msra.mxu0 %v1519
    %1656 = vmatprep.subr.mxu0 0.0
    %1657 = vmatpush1.msra.mxu0 %v1520
    %1658 = vmatprep.subr.mxu0 0.0
    %1659 = vmatpush1.msra.mxu0 %v1521
    %1660 = vmatprep.subr.mxu0 0.0
    %1661 = vmatpush1.msra.mxu0 %v1522
    %1662 = vmatprep.subr.mxu0 0.0
    %1663 = vmatpush1.msra.mxu0 %v1523
    %1664 = vmatprep.subr.mxu0 0.0
    %1665 = vmatpush1.msra.mxu0 %v1524
    %1666 = vmatprep.subr.mxu0 0.0
    %1667 = vmatpush1.msra.mxu0 %v1525
    %1668 = vmatprep.subr.mxu0 0.0
    %1669 = vmatpush1.msra.mxu0 %v1526
    %1670 = vmatprep.mubr.f32.mxu0 %v1603
    %1671 = vmatmul.mubr.f32.gmra.mrb[0].mxu0 %v1602
    %v1672 = vpop.f32.mrb[0].mxu0
    %v1673 = vadd.f32 0.0, %v1672
    %v1674 = vpop.f32.mrb[0].mxu0
    %1675 = vdwg.mxu0
    %v1676 = vadd.f32 %v1493, %v1673
    %v1677 = vld [vmem:[%s5] sm:$0xff]
    %v1678 = vld [vmem:[%s5 + $0x8] sm:$0xff]
    %v1679 = vld [vmem:[%s5 + $0x10] sm:$0xff]
    %v1680 = vld [vmem:[%s5 + $0x18] sm:$0xff]
    %v1681 = vld [vmem:[%s6] sm:$0x1]
    %v1682 = vmax.f32 %v1601, 0.0
    %vm1683 = vcmask 261120
    %v1685 = vsel %vm1683, %v1682, 0
    %1687 = vmatprep.subr.mxu0 0.0
    %1688 = vmatpush1.msra.mxu0 %v1677
    %1689 = vmatprep.subr.mxu0 0.0
    %1690 = vmatpush1.msra.mxu0 %v1678
    %1691 = vmatprep.subr.mxu0 0.0
    %1692 = vmatpush1.msra.mxu0 %v1679
    %1693 = vmatprep.subr.mxu0 0.0
    %1694 = vmatpush1.msra.mxu0 %v1680
    %1695 = vmatprep.subr.mxu0 0.0
    %1696 = vmatpush1.msra.mxu0 0.0
    %1697 = vmatprep.subr.mxu0 0.0
    %1698 = vmatpush1.msra.mxu0 0.0
    %1699 = vmatprep.subr.mxu0 0.0
    %1700 = vmatpush1.msra.mxu0 0.0
    %1701 = vmatprep.subr.mxu0 0.0
    %1702 = vmatpush1.msra.mxu0 0.0
    %1703 = vmatprep.subr.mxu0 0.0
    %1704 = vmatpush1.msra.mxu0 0.0
    %1705 = vmatprep.subr.mxu0 0.0
    %1706 = vmatpush1.msra.mxu0 0.0
    %1707 = vmatprep.subr.mxu0 0.0
    %1708 = vmatpush1.msra.mxu0 0.0
    %1709 = vmatprep.subr.mxu0 0.0
    %1710 = vmatpush1.msra.mxu0 0.0
    %1711 = vmatprep.subr.mxu0 0.0
    %1712 = vmatpush1.msra.mxu0 0.0
    %1713 = vmatprep.subr.mxu0 0.0
    %1714 = vmatpush1.msra.mxu0 0.0
    %1715 = vmatprep.subr.mxu0 0.0
    %1716 = vmatpush1.msra.mxu0 0.0
    %1717 = vmatprep.subr.mxu0 0.0
    %1718 = vmatpush1.msra.mxu0 0.0
    %1719 = vmatprep.subr.mxu0 0.0
    %1720 = vmatpush1.msra.mxu0 0.0
    %1721 = vmatprep.subr.mxu0 0.0
    %1722 = vmatpush1.msra.mxu0 0.0
    %1723 = vmatprep.subr.mxu0 0.0
    %1724 = vmatpush1.msra.mxu0 0.0
    %1725 = vmatprep.subr.mxu0 0.0
    %1726 = vmatpush1.msra.mxu0 0.0
    %1727 = vmatprep.subr.mxu0 0.0
    %1728 = vmatpush1.msra.mxu0 0.0
    %1729 = vmatprep.subr.mxu0 0.0
    %1730 = vmatpush1.msra.mxu0 0.0
    %1731 = vmatprep.subr.mxu0 0.0
    %1732 = vmatpush1.msra.mxu0 0.0
    %1733 = vmatprep.subr.mxu0 0.0
    %1734 = vmatpush1.msra.mxu0 0.0
    %1735 = vmatprep.subr.mxu0 0.0
    %1736 = vmatpush1.msra.mxu0 0.0
    %1737 = vmatprep.subr.mxu0 0.0
    %1738 = vmatpush1.msra.mxu0 0.0
    %1739 = vmatprep.subr.mxu0 0.0
    %1740 = vmatpush1.msra.mxu0 0.0
    %1741 = vmatprep.subr.mxu0 0.0
    %1742 = vmatpush1.msra.mxu0 0.0
    %1743 = vmatprep.subr.mxu0 0.0
    %1744 = vmatpush1.msra.mxu0 0.0
    %1745 = vmatprep.subr.mxu0 0.0
    %1746 = vmatpush1.msra.mxu0 0.0
    %1747 = vmatprep.subr.mxu0 0.0
    %1748 = vmatpush1.msra.mxu0 0.0
    %1749 = vmatprep.subr.mxu0 0.0
    %1750 = vmatpush1.msra.mxu0 0.0
    %1751 = vmatprep.mubr.f32.mxu0 0.0
    %1752 = vmatmul.mubr.f32.gmra.mrb[0].mxu0 %v1685
    %v1753 = vpop.f32.mrb[0].mxu0
    %v1754 = vadd.f32 %v1681, %v1753
    %v1755 = vpop.f32.mrb[0].mxu0
    %1756 = vdwg.mxu0
    %vm1757 = vcmask 73728
    %1758 = vst.msk [vmem:[#allocation2] sm:$0x1] %vm1757, %v1754
    %v1759 = vmax.f32 %v1676, 0.0
    %v1761 = vsel %vm1683, %v1759, 0
    %1763 = vmatprep.subr.mxu0 0.0
    %1764 = vmatpush1.msra.mxu0 %v1677
    %1765 = vmatprep.subr.mxu0 0.0
    %1766 = vmatpush1.msra.mxu0 %v1678
    %1767 = vmatprep.subr.mxu0 0.0
    %1768 = vmatpush1.msra.mxu0 %v1679
    %1769 = vmatprep.subr.mxu0 0.0
    %1770 = vmatpush1.msra.mxu0 %v1680
    %1771 = vmatprep.subr.mxu0 0.0
    %1772 = vmatpush1.msra.mxu0 0.0
    %1773 = vmatprep.subr.mxu0 0.0
    %1774 = vmatpush1.msra.mxu0 0.0
    %1775 = vmatprep.subr.mxu0 0.0
    %1776 = vmatpush1.msra.mxu0 0.0
    %1777 = vmatprep.subr.mxu0 0.0
    %1778 = vmatpush1.msra.mxu0 0.0
    %1779 = vmatprep.subr.mxu0 0.0
    %1780 = vmatpush1.msra.mxu0 0.0
    %1781 = vmatprep.subr.mxu0 0.0
    %1782 = vmatpush1.msra.mxu0 0.0
    %1783 = vmatprep.subr.mxu0 0.0
    %1784 = vmatpush1.msra.mxu0 0.0
    %1785 = vmatprep.subr.mxu0 0.0
    %1786 = vmatpush1.msra.mxu0 0.0
    %1787 = vmatprep.subr.mxu0 0.0
    %1788 = vmatpush1.msra.mxu0 0.0
    %1789 = vmatprep.subr.mxu0 0.0
    %1790 = vmatpush1.msra.mxu0 0.0
    %1791 = vmatprep.subr.mxu0 0.0
    %1792 = vmatpush1.msra.mxu0 0.0
    %1793 = vmatprep.subr.mxu0 0.0
    %1794 = vmatpush1.msra.mxu0 0.0
    %1795 = vmatprep.subr.mxu0 0.0
    %1796 = vmatpush1.msra.mxu0 0.0
    %1797 = vmatprep.subr.mxu0 0.0
    %1798 = vmatpush1.msra.mxu0 0.0
    %1799 = vmatprep.subr.mxu0 0.0
    %1800 = vmatpush1.msra.mxu0 0.0
    %1801 = vmatprep.subr.mxu0 0.0
    %1802 = vmatpush1.msra.mxu0 0.0
    %1803 = vmatprep.subr.mxu0 0.0
    %1804 = vmatpush1.msra.mxu0 0.0
    %1805 = vmatprep.subr.mxu0 0.0
    %1806 = vmatpush1.msra.mxu0 0.0
    %1807 = vmatprep.subr.mxu0 0.0
    %1808 = vmatpush1.msra.mxu0 0.0
    %1809 = vmatprep.subr.mxu0 0.0
    %1810 = vmatpush1.msra.mxu0 0.0
    %1811 = vmatprep.subr.mxu0 0.0
    %1812 = vmatpush1.msra.mxu0 0.0
    %1813 = vmatprep.subr.mxu0 0.0
    %1814 = vmatpush1.msra.mxu0 0.0
    %1815 = vmatprep.subr.mxu0 0.0
    %1816 = vmatpush1.msra.mxu0 0.0
    %1817 = vmatprep.subr.mxu0 0.0
    %1818 = vmatpush1.msra.mxu0 0.0
    %1819 = vmatprep.subr.mxu0 0.0
    %1820 = vmatpush1.msra.mxu0 0.0
    %1821 = vmatprep.subr.mxu0 0.0
    %1822 = vmatpush1.msra.mxu0 0.0
    %1823 = vmatprep.subr.mxu0 0.0
    %1824 = vmatpush1.msra.mxu0 0.0
    %1825 = vmatprep.subr.mxu0 0.0
    %1826 = vmatpush1.msra.mxu0 0.0
    %1827 = vmatprep.mubr.f32.mxu0 0.0
    %1828 = vmatmul.mubr.f32.gmra.mrb[0].mxu0 %v1761
    %v1829 = vpop.f32.mrb[0].mxu0
    %v1830 = vadd.f32 %v1681, %v1829
    %v1831 = vpop.f32.mrb[0].mxu0
    %1832 = vdwg.mxu0
    %1833 = vst.msk [vmem:[#allocation2 + $0x1] sm:$0x1] %vm1757, %v1830
    // Predicated region
    $region30: #{task_pipeline_forward.1} parent=1 // pred_check
      _
    $region31: #{task_pipeline_forward.1} parent=1 // pred_check_branch
      %1835 = sbr.rel (0) target = $region33
    $region32: #{task_pipeline_forward.1} parent=1 // pred_region
      %s1837 = ssub.s32 32, 32
      %1838 = vsyncadd [#allocation3], %s1837
      %s1840 = sshll.u32 [#allocation2], 4
      %s1841 = int_to_ptr.vmem [resolvable:$true] %s1840
      %1843 = dma.vmem_to_hbm [thread:$0]  %s1841, 32, %s7, [#allocation3]
    $region33: #{task_pipeline_forward.1} parent=1 // pred_fallthru
      _
    // Predicated region
    $region34: #{task_pipeline_forward.1} parent=1 // pred_check
      _
    $region35: #{task_pipeline_forward.1} parent=1 // pred_check_branch
      %1845 = sbr.rel (0) target = $region37
    $region36: #{task_pipeline_forward.1} parent=1 // pred_region
      %1846 = dma.done [#allocation3], 32
    $region37: #{task_pipeline_forward.1} parent=1 // pred_fallthru
      _
    %1847 = vsyncpa [#allocation3], 1

</llo_original>
